<compile_context>
chip_gen: v7x
topology: tpu7x:2x2x1
jax: 0.10.0
libtpu: 0.0.40
codegen_flags: <defaults>
</compile_context>

<pallas_src>
import functools

import numpy as np
import jax
import jax.numpy as jnp
from jax.experimental import pallas as pl
from jax.experimental.pallas import tpu as pltpu


def _round_up(v, m):
    return (v + m - 1) // m * m


def _pick_tile_d(Do, Ho, target_m=128):
    """Largest divisor of Do such that the matmul M = tile_d*Ho stays <= 128."""
    cap = max(target_m, Ho)
    best = 1
    for t in range(1, Do + 1):
        if Do % t == 0 and t * Ho <= cap:
            best = t
    return best


def _conv3d_relu_kernel(x_ref, w_ref, b_ref, o_ref, lhs_ref, *,
                        tile_d, Ho, WpC_pad, WoC_pad, kd, kh):
    """Grid step (n, j): batch element n, output depths [j*tile_d, (j+1)*tile_d).

    x_ref:   (1, Dp, Hp, WpC_pad)           padded f32 input slab, (W, Cin) merged
    w_ref:   (kd, kh*WpC_pad, WoC_pad)      Toeplitz RHS (kh, kw, Cin folded into K), bf16
    b_ref:   (1, WoC_pad)                   bias tiled over Wo (f32)
    o_ref:   (1, tile_d, Ho, WoC_pad)       output tile, lane-dense
    lhs_ref: (tile_d+kd-1, Ho, kh*WpC_pad)  bf16 im2col staging scratch
    """
    j = pl.program_id(1)
    d0 = pl.multiple_of(j * tile_d, tile_d)
    halo_d = tile_d + kd - 1
    K = kh * WpC_pad

    # Stage the bf16 LHS once per grid step (cast hoisted out of the tap loop).
    # Each zh window lands in a lane-aligned 128*k-wide slot, so these stores
    # are unmasked and the per-zd slices below touch only the leading dim.
    for zh in range(kh):
        win = x_ref[0, pl.ds(d0, halo_d), zh:zh + Ho, :]
        lhs_ref[:, :, zh * WpC_pad:(zh + 1) * WpC_pad] = win.astype(lhs_ref.dtype)

    # kd dense MXU matmuls with K = kh*WpC_pad; f32 accumulation in registers
    # (tile_d*Ho x WoC_pad = 128x128 f32 = 16 vregs: no spill risk).
    acc = jnp.zeros((tile_d * Ho, WoC_pad), jnp.float32)
    for zd in range(kd):
        lhs = lhs_ref[zd:zd + tile_d].reshape(tile_d * Ho, K)
        acc += jnp.dot(lhs, w_ref[zd], preferred_element_type=jnp.float32)

    acc = acc + b_ref[...]            # bias broadcast over rows (f32)
    acc = jnp.maximum(acc, 0.0)       # ReLU epilogue (f32)
    o_ref[...] = acc.reshape(1, tile_d, Ho, WoC_pad).astype(o_ref.dtype)


def build_conv3d_relu_rhs(weight, bias, *, in_w, padding=1,
                          mxu_dtype=jnp.bfloat16):
    """Weight-only preprocessing; hoist/cache this across forward passes.

    Builds the Toeplitz-expanded matmul RHS
        rhs[zd, zh*WpC_pad + wp*Cin + c, w*Cout + o] = W[o, c, zd, zh, wp - w]
    (zero where wp - w is outside [0, kw)) and the Wo-tiled bias row.
    """
    C2, C1, kd, kh, kw = weight.shape
    p = padding
    Wp = in_w + 2 * p
    Wo = Wp - kw + 1
    WpC, WoC = Wp * C1, Wo * C2
    WpC_pad, WoC_pad = _round_up(WpC, 128), _round_up(WoC, 128)

    wt = jnp.transpose(weight, (2, 3, 4, 1, 0)).astype(jnp.float32)  # (kd,kh,kw,C1,C2)
    wp_idx = np.arange(Wp)[:, None]
    w_idx = np.arange(Wo)[None, :]
    tap = wp_idx - w_idx                                  # (Wp, Wo)
    valid = (tap >= 0) & (tap < kw)
    tap_c = np.clip(tap, 0, kw - 1)                       # static gather indices
    t = wt[:, :, tap_c, :, :]                             # (kd, kh, Wp, Wo, C1, C2)
    t = jnp.where(jnp.asarray(valid)[None, None, :, :, None, None], t, 0.0)
    t = jnp.transpose(t, (0, 1, 2, 4, 3, 5))              # (kd, kh, Wp, C1, Wo, C2)
    t = t.reshape(kd, kh, WpC, WoC)
    t = jnp.pad(t, ((0, 0), (0, 0), (0, WpC_pad - WpC), (0, WoC_pad - WoC)))
    t = t.reshape(kd, kh * WpC_pad, WoC_pad).astype(mxu_dtype)

    b_row = jnp.tile(bias.astype(jnp.float32), Wo)        # index w*C2 + o -> bias[o]
    b_row = jnp.pad(b_row, (0, WoC_pad - WoC)).reshape(1, WoC_pad)
    return t, b_row


def conv3d_relu(x_ncdhw, weight, bias, *, padding=1, tile_d=None,
                mxu_dtype=jnp.bfloat16, out_dtype=None):
    """Conv3d(k, stride=1, padding=p, dilation=1, groups=1, bias=True) + ReLU.

    Matches the YOWO Conv3d(c1, c2, k=3, p=1, s=1, act_type='relu',
    norm_type=None, depthwise=False) forward pass.
    """
    N, C1, D, H, W = x_ncdhw.shape
    C2, C1w, kd, kh, kw = weight.shape
    assert C1 == C1w, "groups != 1 is not supported by this kernel"
    p = padding
    out_dtype = x_ncdhw.dtype if out_dtype is None else out_dtype
    # TODO(synk): pass out_dtype=jnp.bfloat16 when the consumer takes bf16 —
    # the output is the largest HBM stream at these shapes.

    Dp, Hp, Wp = D + 2 * p, H + 2 * p, W + 2 * p
    Do, Ho, Wo = Dp - kd + 1, Hp - kh + 1, Wp - kw + 1       # stride=1, dil=1
    assert Do >= 1 and Ho >= 1 and Wo >= 1

    WpC, WoC = Wp * C1, Wo * C2
    WpC_pad, WoC_pad = _round_up(WpC, 128), _round_up(WoC, 128)
    K = kh * WpC_pad

    if tile_d is None or Do % tile_d != 0:
        tile_d = _pick_tile_d(Do, Ho)         # largest divisor of Do, M <= 128
    halo_d = tile_d + kd - 1

    # ---- per-call layout plumbing (runs once in XLA, outside the kernel) ----
    # NCDHW -> NDHWC, zero-pad spatial dims, merge (W, Cin), pad to 128 lanes.
    # TODO(synk): fold the zero padding into the kernel and tile Dp/Hp with
    # halos for large activations (matters most under v7x's 64 MiB VMEM).
    x = jnp.transpose(x_ncdhw, (0, 2, 3, 4, 1)).astype(jnp.float32)
    x = jnp.pad(x, ((0, 0), (p, p), (p, p), (p, p), (0, 0)))
    x = x.reshape(N, Dp, Hp, WpC)
    x = jnp.pad(x, ((0, 0), (0, 0), (0, 0), (0, WpC_pad - WpC)))

    # Weight-only preprocessing; cache across calls when weights are static.
    rhs, b_row = build_conv3d_relu_rhs(weight, bias, in_w=W, padding=p,
                                       mxu_dtype=mxu_dtype)

    kernel = functools.partial(_conv3d_relu_kernel, tile_d=tile_d, Ho=Ho,
                               WpC_pad=WpC_pad, WoC_pad=WoC_pad, kd=kd, kh=kh)

    # Derive the VMEM limit from the actual footprint (double-buffered
    # pipeline buffers + staging scratch) with headroom, instead of a flat cap.
    out_size = jnp.dtype(out_dtype).itemsize
    mxu_size = jnp.dtype(mxu_dtype).itemsize
    footprint = (2 * (Dp * Hp * WpC_pad * 4
                      + kd * K * WoC_pad * mxu_size
                      + WoC_pad * 4
                      + tile_d * Ho * WoC_pad * out_size)
                 + halo_d * Ho * K * mxu_size)
    vmem_limit = int(min(2 * footprint + (4 << 20), 64 << 20))
    # TODO(synk): on v7x, add pipeline_mode=pl.Buffered(1) to the grid-constant
    # weight/bias BlockSpecs to drop their second pipeline buffer.

    out = pl.pallas_call(
        kernel,
        out_shape=jax.ShapeDtypeStruct((N, Do, Ho, WoC_pad), out_dtype),
        grid=(N, Do // tile_d),
        in_specs=[
            # Full padded slab per batch element; constant over j so it is
            # DMA'd once per n and stays VMEM-resident across depth tiles.
            pl.BlockSpec((1, Dp, Hp, WpC_pad), lambda n, j: (n, 0, 0, 0)),
            # Toeplitz RHS + bias: VMEM resident across the whole grid.
            pl.BlockSpec((kd, K, WoC_pad), lambda n, j: (0, 0, 0)),
            pl.BlockSpec((1, WoC_pad), lambda n, j: (0, 0)),
        ],
        out_specs=pl.BlockSpec((1, tile_d, Ho, WoC_pad),
                               lambda n, j: (n, j, 0, 0)),
        scratch_shapes=[pltpu.VMEM((halo_d, Ho, K), mxu_dtype)],
        compiler_params=pltpu.CompilerParams(
            # Batch leads so v7x's two TensorCores each take one element; the
            # depth tiles are independent so that axis is parallel as well.
            dimension_semantics=("parallel", "parallel"),
            vmem_limit_bytes=vmem_limit),
    )(x, rhs, b_row)

    out = out[..., :WoC].reshape(N, Do, Ho, Wo, C2)          # drop lane padding
    return jnp.transpose(out, (0, 4, 1, 2, 3))               # back to NCDHW


def _reference(x_ncdhw, w_oidhw, bias, *, padding=1):
    out = jax.lax.conv_general_dilated(
        x_ncdhw, w_oidhw,
        window_strides=(1, 1, 1),
        padding=[(padding, padding)] * 3,
        dimension_numbers=("NCDHW", "OIDHW", "NCDHW"),
        precision=jax.lax.Precision.HIGHEST,
    )
    out = out + bias[None, :, None, None, None]
    return jnp.maximum(out, 0.0)


if __name__ == "__main__":
    # Small shapes: batch=2, c1=4, c2=8, D=8, H=W=16, k=3, p=1, s=1.
    N, C1, C2, D, H, W, K, P = 2, 4, 8, 8, 16, 16, 3, 1

    key = jax.random.PRNGKey(0)
    kx, kw_, kb = jax.random.split(key, 3)

    # Deterministic, PyTorch-Conv3d-like init (kaiming-uniform-ish scaling).
    fan_in = C1 * K * K * K
    bound = 1.0 / (fan_in ** 0.5)
    x = jax.random.normal(kx, (N, C1, D, H, W), dtype=jnp.float32)
    weight = jax.random.uniform(kw_, (C2, C1, K, K, K),
                                minval=-bound, maxval=bound, dtype=jnp.float32)
    bias = jax.random.uniform(kb, (C2,), minval=-bound, maxval=bound,
                              dtype=jnp.float32)

    out = conv3d_relu(x, weight, bias, padding=P)
    out = jax.block_until_ready(out)

    # Reference on the same bf16-rounded operands the kernel feeds the MXU
    # (f32 accumulation on both sides), so the comparison stays tight.
    # NOTE: bf16 MXU inputs are an intentional precision tradeoff vs PyTorch's
    # f32 Conv3d; pass mxu_dtype=jnp.float32 if strict f32 parity is required.
    xr = x.astype(jnp.bfloat16).astype(jnp.float32)
    wr = weight.astype(jnp.bfloat16).astype(jnp.float32)
    ref = _reference(xr, wr, bias, padding=P)

    assert out.shape == (N, C2, D, H, W), out.shape
    max_err = float(jnp.max(jnp.abs(out - ref)))
    assert max_err < 2e-3, max_err

    print("KERNEL_OK")
</pallas_src>

<mosaic_0001>
module attributes {stable_mosaic.version = 11 : i64} {
  func.func @_conv3d_relu_kernel(%arg0: i32, %arg1: i32, %arg2: memref<1x10x18x128xf32, #tpu.memory_space<vmem>>, %arg3: memref<3x384x128xbf16, #tpu.memory_space<vmem>>, %arg4: memref<1x128xf32, #tpu.memory_space<vmem>>, %arg5: memref<1x8x16x128xf32, #tpu.memory_space<vmem>>, %arg6: memref<10x16x384xbf16, #tpu.memory_space<vmem>>) attributes {dimension_semantics = [#tpu.dimension_semantics<parallel>, #tpu.dimension_semantics<parallel>], iteration_bounds = array<i64: 2, 1>, scalar_prefetch = 0 : i64, scratch_operands = 1 : i64, tpu.core_type = #tpu.core_type<tc>, window_params = [{transform_indices = @transform_0, window_bounds = array<i64: 1, 10, 18, 128>}, {pipeline_mode = #tpu.pipeline_mode<synchronous>, transform_indices = @transform_1, window_bounds = array<i64: 3, 384, 128>}, {pipeline_mode = #tpu.pipeline_mode<synchronous>, transform_indices = @transform_2, window_bounds = array<i64: 1, 128>}, {transform_indices = @transform_3, window_bounds = array<i64: 1, 8, 16, 128>}]} {
    %c8_i32 = arith.constant 8 : i32
    %0 = arith.muli %arg1, %c8_i32 : i32
    %1 = tpu.assume_multiple %0, 8 : i32
    %c0 = arith.constant 0 : index
    %2 = arith.index_cast %1 : i32 to index
    %c0_0 = arith.constant 0 : index
    %c0_1 = arith.constant 0 : index
    %3 = vector.load %arg2[%c0, %2, %c0_0, %c0_1] : memref<1x10x18x128xf32, #tpu.memory_space<vmem>>, vector<1x10x16x128xf32>
    %4 = vector.shape_cast %3 : vector<1x10x16x128xf32> to vector<10x16x128xf32>
    %5 = arith.truncf %4 : vector<10x16x128xf32> to vector<10x16x128xbf16>
    %c0_2 = arith.constant 0 : index
    %c0_3 = arith.constant 0 : index
    %c0_4 = arith.constant 0 : index
    %6 = vector.load %arg6[%c0_2, %c0_3, %c0_4] : memref<10x16x384xbf16, #tpu.memory_space<vmem>>, vector<10x16x128xbf16>
    tpu.vector_store %arg6[%c0_2, %c0_3, %c0_4], %5 {strides = array<i32>} : memref<10x16x384xbf16, #tpu.memory_space<vmem>>, vector<10x16x128xbf16>,
    %c0_5 = arith.constant 0 : index
    %7 = arith.index_cast %1 : i32 to index
    %c1 = arith.constant 1 : index
    %c0_6 = arith.constant 0 : index
    %8 = vector.load %arg2[%c0_5, %7, %c1, %c0_6] : memref<1x10x18x128xf32, #tpu.memory_space<vmem>>, vector<1x10x16x128xf32>
    %9 = vector.shape_cast %8 : vector<1x10x16x128xf32> to vector<10x16x128xf32>
    %10 = arith.truncf %9 : vector<10x16x128xf32> to vector<10x16x128xbf16>
    %c0_7 = arith.constant 0 : index
    %c0_8 = arith.constant 0 : index
    %c128 = arith.constant 128 : index
    %11 = vector.load %arg6[%c0_7, %c0_8, %c128] : memref<10x16x384xbf16, #tpu.memory_space<vmem>>, vector<10x16x128xbf16>
    tpu.vector_store %arg6[%c0_7, %c0_8, %c128], %10 {strides = array<i32>} : memref<10x16x384xbf16, #tpu.memory_space<vmem>>, vector<10x16x128xbf16>,
    %c0_9 = arith.constant 0 : index
    %12 = arith.index_cast %1 : i32 to index
    %c2 = arith.constant 2 : index
    %c0_10 = arith.constant 0 : index
    %13 = vector.load %arg2[%c0_9, %12, %c2, %c0_10] : memref<1x10x18x128xf32, #tpu.memory_space<vmem>>, vector<1x10x16x128xf32>
    %14 = vector.shape_cast %13 : vector<1x10x16x128xf32> to vector<10x16x128xf32>
    %15 = arith.truncf %14 : vector<10x16x128xf32> to vector<10x16x128xbf16>
    %c0_11 = arith.constant 0 : index
    %c0_12 = arith.constant 0 : index
    %c256 = arith.constant 256 : index
    %16 = vector.load %arg6[%c0_11, %c0_12, %c256] : memref<10x16x384xbf16, #tpu.memory_space<vmem>>, vector<10x16x128xbf16>
    tpu.vector_store %arg6[%c0_11, %c0_12, %c256], %15 {strides = array<i32>} : memref<10x16x384xbf16, #tpu.memory_space<vmem>>, vector<10x16x128xbf16>,
    %cst = arith.constant 0.000000e+00 : f32
    %17 = vector.broadcast %cst : f32 to vector<128x128xf32>
    %c0_13 = arith.constant 0 : index
    %c0_14 = arith.constant 0 : index
    %c0_15 = arith.constant 0 : index
    %18 = vector.load %arg6[%c0_13, %c0_14, %c0_15] : memref<10x16x384xbf16, #tpu.memory_space<vmem>>, vector<8x16x384xbf16>
    %19 = vector.shape_cast %18 : vector<8x16x384xbf16> to vector<128x384xbf16>
    %c0_16 = arith.constant 0 : index
    %c0_17 = arith.constant 0 : index
    %c0_18 = arith.constant 0 : index
    %20 = vector.load %arg3[%c0_16, %c0_17, %c0_18] : memref<3x384x128xbf16, #tpu.memory_space<vmem>>, vector<1x384x128xbf16>
    %21 = vector.shape_cast %20 : vector<1x384x128xbf16> to vector<384x128xbf16>
    %cst_19 = arith.constant dense<0.000000e+00> : vector<128x128xf32>
    %22 = tpu.matmul %19, %21, %cst_19 {dimension_numbers = #tpu.dot_dimension_numbers<[1], [0], [0], [1], [0, 0, 1, 1], [], []>} : vector<128x384xbf16>, vector<384x128xbf16>, vector<128x128xf32> -> vector<128x128xf32>
    %23 = arith.addf %17, %22 : vector<128x128xf32>
    %c1_20 = arith.constant 1 : index
    %c0_21 = arith.constant 0 : index
    %c0_22 = arith.constant 0 : index
    %24 = vector.load %arg6[%c1_20, %c0_21, %c0_22] : memref<10x16x384xbf16, #tpu.memory_space<vmem>>, vector<8x16x384xbf16>
    %25 = vector.shape_cast %24 : vector<8x16x384xbf16> to vector<128x384xbf16>
    %c1_23 = arith.constant 1 : index
    %c0_24 = arith.constant 0 : index
    %c0_25 = arith.constant 0 : index
    %26 = vector.load %arg3[%c1_23, %c0_24, %c0_25] : memref<3x384x128xbf16, #tpu.memory_space<vmem>>, vector<1x384x128xbf16>
    %27 = vector.shape_cast %26 : vector<1x384x128xbf16> to vector<384x128xbf16>
    %cst_26 = arith.constant dense<0.000000e+00> : vector<128x128xf32>
    %28 = tpu.matmul %25, %27, %cst_26 {dimension_numbers = #tpu.dot_dimension_numbers<[1], [0], [0], [1], [0, 0, 1, 1], [], []>} : vector<128x384xbf16>, vector<384x128xbf16>, vector<128x128xf32> -> vector<128x128xf32>
    %29 = arith.addf %23, %28 : vector<128x128xf32>
    %c2_27 = arith.constant 2 : index
    %c0_28 = arith.constant 0 : index
    %c0_29 = arith.constant 0 : index
    %30 = vector.load %arg6[%c2_27, %c0_28, %c0_29] : memref<10x16x384xbf16, #tpu.memory_space<vmem>>, vector<8x16x384xbf16>
    %31 = vector.shape_cast %30 : vector<8x16x384xbf16> to vector<128x384xbf16>
    %c2_30 = arith.constant 2 : index
    %c0_31 = arith.constant 0 : index
    %c0_32 = arith.constant 0 : index
    %32 = vector.load %arg3[%c2_30, %c0_31, %c0_32] : memref<3x384x128xbf16, #tpu.memory_space<vmem>>, vector<1x384x128xbf16>
    %33 = vector.shape_cast %32 : vector<1x384x128xbf16> to vector<384x128xbf16>
    %cst_33 = arith.constant dense<0.000000e+00> : vector<128x128xf32>
    %34 = tpu.matmul %31, %33, %cst_33 {dimension_numbers = #tpu.dot_dimension_numbers<[1], [0], [0], [1], [0, 0, 1, 1], [], []>} : vector<128x384xbf16>, vector<384x128xbf16>, vector<128x128xf32> -> vector<128x128xf32>
    %35 = arith.addf %29, %34 : vector<128x128xf32>
    %c0_34 = arith.constant 0 : index
    %c0_35 = arith.constant 0 : index
    %36 = vector.load %arg4[%c0_34, %c0_35] : memref<1x128xf32, #tpu.memory_space<vmem>>, vector<1x128xf32>
    %37 = vector.broadcast %36 : vector<1x128xf32> to vector<128x128xf32>
    %38 = arith.addf %35, %37 : vector<128x128xf32>
    %cst_36 = arith.constant 0.000000e+00 : f32
    %39 = vector.broadcast %cst_36 : f32 to vector<128x128xf32>
    %40 = arith.maximumf %38, %39 : vector<128x128xf32>
    %41 = vector.shape_cast %40 : vector<128x128xf32> to vector<1x8x16x128xf32>
    %c0_37 = arith.constant 0 : index
    %c0_38 = arith.constant 0 : index
    %c0_39 = arith.constant 0 : index
    %c0_40 = arith.constant 0 : index
    %42 = vector.load %arg5[%c0_37, %c0_38, %c0_39, %c0_40] : memref<1x8x16x128xf32, #tpu.memory_space<vmem>>, vector<1x8x16x128xf32>
    tpu.vector_store %arg5[%c0_37, %c0_38, %c0_39, %c0_40], %41 {strides = array<i32>} : memref<1x8x16x128xf32, #tpu.memory_space<vmem>>, vector<1x8x16x128xf32>,
    return
  }
  func.func @transform_0(%arg0: i32, %arg1: i32) -> (i32, i32, i32, i32) {
    %c0_i32 = arith.constant 0 : i32
    %c0_i32_0 = arith.constant 0 : i32
    %c0_i32_1 = arith.constant 0 : i32
    %c0_i32_2 = arith.constant 0 : i32
    return %arg0, %c0_i32, %c0_i32_0, %c0_i32_1 : i32, i32, i32, i32
  }
  func.func @transform_1(%arg0: i32, %arg1: i32) -> (i32, i32, i32) {
    %c0_i32 = arith.constant 0 : i32
    %c0_i32_0 = arith.constant 0 : i32
    %c0_i32_1 = arith.constant 0 : i32
    %c0_i32_2 = arith.constant 0 : i32
    return %c0_i32, %c0_i32_0, %c0_i32_1 : i32, i32, i32
  }
  func.func @transform_2(%arg0: i32, %arg1: i32) -> (i32, i32) {
    %c0_i32 = arith.constant 0 : i32
    %c0_i32_0 = arith.constant 0 : i32
    %c0_i32_1 = arith.constant 0 : i32
    return %c0_i32, %c0_i32_0 : i32, i32
  }
  func.func @transform_3(%arg0: i32, %arg1: i32) -> (i32, i32, i32, i32) {
    %c0_i32 = arith.constant 0 : i32
    %c0_i32_0 = arith.constant 0 : i32
    %c0_i32_1 = arith.constant 0 : i32
    return %arg0, %arg1, %c0_i32, %c0_i32_0 : i32, i32, i32, i32
  }
}

</mosaic_0001>

<llo_original>
// kernel: tpu_custom_call.1
$region0: #{tpu_custom_call.1}
  #allocation0 [shape = 'u32[]', space=smem, size = 0x4, offset = 0x4, fixed_abs, tag = 'smem constant byte address 0x4 - core index']
  #allocation1 [shape = 'u32[144,128]{1,0:T(1,128)}', space=vmem, size = 0x12000, scoped, tag = 'internal scratch']
  #allocation2 [shape = 'bf16[10,16,384]{2,1,0:T(16,128)(2,1)}', space=vmem, size = 0x1e000, scoped, tag = 'scratch operand']
  %s0 = inlined_call_operand.vmem [shape: f32[2,10,18,128], index: 0, kind: input, shape index: {}]
  %s1 = inlined_call_operand.vmem [shape: bf16[3,384,128], index: 1, kind: input, shape index: {}]
  %s2 = inlined_call_operand.vmem [shape: f32[1,128], index: 2, kind: input, shape index: {}]
  %s3 = inlined_call_operand.hbm [shape: f32[2,8,16,128], index: 3, kind: output, shape index: {}]
  %s4 = sld [smem:[#allocation0]]
  $region45: #{tpu_custom_call.1} parent=0
    _
  %s6 = ssub.s32 1, %s4
  %s7 = scalar_select 0, %s6, %s4
  $region1: #{tpu_custom_call.1} parent=0
    #allocation3 [shape = 'u8[131072]{0}', space=vmem, size = 0x20000, scoped, tag = 'output window, operand 0']
    #allocation4 [shape = 's32[2]{0}', space=sflag, size = 0x8, scoped, tag = 'scoped memory for tpu_custom_call.1']
    %8 = vsyncpa [#allocation4], 0
    %s9 = scalar_lea.sflag [#allocation4], 1
    %10 = vsyncpa %s9, 0
    loop: start=0, step=1, limit=4
    $region2: #{tpu_custom_call.1} parent=1 // loop_pre_header
      _
    $region3: #{tpu_custom_call.1} parent=1 // loop_header
      %s12 = sphi 0, %s16
      %p13 = scmp.ge.s32.totalorder %s12, 4
      %s19 = sphi 0, %s31
      %s20 = sphi 0, %s27
      %s21 = sphi 0, %s19
      %s22 = sphi 0, %s20
      %s23 = sphi 0, %s21
      %s24 = sphi 0, %s22
      %s34 = sphi 0, %s36
      %s37 = sphi 0, %s34
      %s38 = sphi 0, %s37
      %s54 = sphi 0, %s38
      %s58 = sphi 0, %s58
      %s60 = sphi 0, %s58
      %s61 = sphi 0, %s60
      %s75 = sphi 0, %s61
      %s79 = sphi 0, %s79
      %s81 = sphi 0, %s79
      %s82 = sphi 0, %s81
      %s96 = sphi 0, %s82
      %s104 = sphi 0, %s106
      %s107 = sphi 0, %s104
      %s108 = sphi 0, %s107
      %s124 = sphi 0, %s108
    $region4: #{tpu_custom_call.1} parent=1 // loop_header_branch
      %15 = sbr.rel (%p13) target = $region8
    $region5: #{tpu_custom_call.1} parent=1 // loop_body
      %s17 = ssub.s32 %s12, 1
      %s18 = ssub.s32 %s12, 2
      %s25 = sadd.s32 1, %s20
      %p26 = scmp.ge.s32.totalorder %s25, 1
      %s27 = scalar_select %p26, 0, %s25
      %s28 = sadd.s32 1, %s19
      %s29 = scalar_select %p26, %s28, %s19
      %p30 = scmp.ge.s32.totalorder %s29, 2
      %s31 = scalar_select %p30, 0, %s29
      %s32 = ssub.s32 %s19, %s31
      %p33 = scmp.eq.s32.totalorder %s32, 0
      %s35 = sadd.s32 %s34, 1
      %s36 = scalar_select %p33, %s34, %s35
      %p39 = pneg %p33
      %p40 = scmp.eq.s32.totalorder %s12, 1
      %p41 = por %p39, %p40
      %p42 = scmp.ne.s32.totalorder %s34, %s37
      %p43 = scmp.eq.s32.totalorder %s12, 0
      %p44 = por %p42, %p43
      %p45 = scmp.ne.s32.totalorder %s34, %s37
      %p46 = scmp.eq.s32.totalorder %s17, 1
      %p47 = por %p45, %p46
      %p48 = scmp.ne.s32.totalorder %s37, %s38
      %p49 = scmp.eq.s32.totalorder %s17, 0
      %p50 = por %p48, %p49
      %p51 = scmp.ne.s32.totalorder %s37, %s38
      %p52 = scmp.eq.s32.totalorder %s18, 1
      %p53 = por %p51, %p52
      %p55 = scmp.ne.s32.totalorder %s38, %s54
      %p56 = scmp.eq.s32.totalorder %s18, 0
      %p57 = por %p55, %p56
      %s59 = sadd.s32 %s58, 1
      %p62 = scmp.eq.s32.totalorder %s12, 1
      %p63 = scmp.ne.s32.totalorder %s58, %s60
      %p64 = scmp.eq.s32.totalorder %s12, 0
      %p65 = por %p63, %p64
      %p66 = scmp.ne.s32.totalorder %s58, %s60
      %p67 = scmp.eq.s32.totalorder %s17, 1
      %p68 = por %p66, %p67
      %p69 = scmp.ne.s32.totalorder %s60, %s61
      %p70 = scmp.eq.s32.totalorder %s17, 0
      %p71 = por %p69, %p70
      %p72 = scmp.ne.s32.totalorder %s60, %s61
      %p73 = scmp.eq.s32.totalorder %s18, 1
      %p74 = por %p72, %p73
      %p76 = scmp.ne.s32.totalorder %s61, %s75
      %p77 = scmp.eq.s32.totalorder %s18, 0
      %p78 = por %p76, %p77
      %s80 = sadd.s32 %s79, 1
      %p83 = scmp.eq.s32.totalorder %s12, 1
      %p84 = scmp.ne.s32.totalorder %s79, %s81
      %p85 = scmp.eq.s32.totalorder %s12, 0
      %p86 = por %p84, %p85
      %p87 = scmp.ne.s32.totalorder %s79, %s81
      %p88 = scmp.eq.s32.totalorder %s17, 1
      %p89 = por %p87, %p88
      %p90 = scmp.ne.s32.totalorder %s81, %s82
      %p91 = scmp.eq.s32.totalorder %s17, 0
      %p92 = por %p90, %p91
      %p93 = scmp.ne.s32.totalorder %s81, %s82
      %p94 = scmp.eq.s32.totalorder %s18, 1
      %p95 = por %p93, %p94
      %p97 = scmp.ne.s32.totalorder %s82, %s96
      %p98 = scmp.eq.s32.totalorder %s18, 0
      %p99 = por %p97, %p98
      %s100 = ssub.s32 %s19, %s31
      %s101 = ssub.s32 %s20, %s27
      %s102 = sor.u32 %s100, %s101
      %p103 = scmp.eq.s32.totalorder %s102, 0
      %s105 = sadd.s32 %s104, 1
      %s106 = scalar_select %p103, %s104, %s105
      %p109 = pneg %p103
      %p110 = scmp.eq.s32.totalorder %s12, 1
      %p111 = por %p109, %p110
      %p112 = scmp.ne.s32.totalorder %s104, %s107
      %p113 = scmp.eq.s32.totalorder %s12, 0
      %p114 = por %p112, %p113
      %p115 = scmp.ne.s32.totalorder %s104, %s107
      %p116 = scmp.eq.s32.totalorder %s17, 1
      %p117 = por %p115, %p116
      %p118 = scmp.ne.s32.totalorder %s107, %s108
      %p119 = scmp.eq.s32.totalorder %s17, 0
      %p120 = por %p118, %p119
      %p121 = scmp.ne.s32.totalorder %s107, %s108
      %p122 = scmp.eq.s32.totalorder %s18, 1
      %p123 = por %p121, %p122
      %p125 = scmp.ne.s32.totalorder %s108, %s124
      %p126 = scmp.eq.s32.totalorder %s18, 0
      %p127 = por %p125, %p126
      %p128 = scmp.le.s32.totalorder 1, %s12
      %p129 = scmp.lt.s32.totalorder %s12, 3
      %p130 = pnand %p128, %p129
      %p131 = pneg %p130
      // Predicated region
      $region9: #{tpu_custom_call.1} parent=5 // pred_check
        _
      $region10: #{tpu_custom_call.1} parent=5 // pred_check_branch
        %133 = sbr.rel (%p130) target = $region12
      $region11: #{tpu_custom_call.1} parent=5 // pred_region
        %s134 = ssub.s32 %s12, 1
        // Predicated region
        $region13: #{tpu_custom_call.1} parent=11 // pred_check
          %p135 = pneg %p71
        $region14: #{tpu_custom_call.1} parent=11 // pred_check_branch
          %137 = sbr.rel (%p135) target = $region16
        $region15: #{tpu_custom_call.1} parent=11 // pred_region
          _
        $region16: #{tpu_custom_call.1} parent=11 // pred_fallthru
          _
        // Predicated region
        $region17: #{tpu_custom_call.1} parent=11 // pred_check
          %p138 = pneg %p92
        $region18: #{tpu_custom_call.1} parent=11 // pred_check_branch
          %140 = sbr.rel (%p138) target = $region20
        $region19: #{tpu_custom_call.1} parent=11 // pred_region
          _
        $region20: #{tpu_custom_call.1} parent=11 // pred_fallthru
          _
      $region12: #{tpu_custom_call.1} parent=5 // pred_fallthru
        _
      %p141 = scmp.lt.s32.totalorder %s12, 2
      // Predicated region
      $region21: #{tpu_custom_call.1} parent=5 // pred_check
        %p142 = pneg %p141
      $region22: #{tpu_custom_call.1} parent=5 // pred_check_branch
        %144 = sbr.rel (%p142) target = $region24
      $region23: #{tpu_custom_call.1} parent=5 // pred_region
        // Predicated region
        $region25: #{tpu_custom_call.1} parent=23 // pred_check
          %p145 = pneg %p44
        $region26: #{tpu_custom_call.1} parent=23 // pred_check_branch
          %147 = sbr.rel (%p145) target = $region28
        $region27: #{tpu_custom_call.1} parent=23 // pred_region
          %p148 = scmp.lt.s32.totalorder %s19, 1
          %s149 = scalar_select %p148, %s19, 1
          %s150 = smul.addr %s149, 30
          %s151 = smul.addr %s150, 8
          %s152 = scalar_lea.vmem %s0, %s151
        $region28: #{tpu_custom_call.1} parent=23 // pred_fallthru
          _
      $region24: #{tpu_custom_call.1} parent=5 // pred_fallthru
        _
      %p153 = scmp.le.s32.totalorder 1, %s12
      %p154 = scmp.lt.s32.totalorder %s12, 3
      %p155 = pnand %p153, %p154
      %p156 = pneg %p155
      // Predicated region
      $region29: #{tpu_custom_call.1} parent=5 // pred_check
        _
      $region30: #{tpu_custom_call.1} parent=5 // pred_check_branch
        %158 = sbr.rel (%p155) target = $region32
      $region31: #{tpu_custom_call.1} parent=5 // pred_region
        %s159 = ssub.s32 %s12, 1
        %p160 = scmp.lt.s32.totalorder %s21, 1
        %s161 = scalar_select %p160, %s21, 1
        %s162 = smul.addr %s161, 30
        %s163 = smul.addr %s162, 8
        %s164 = scalar_lea.vmem %s0, %s163
        %p165 = pneg %p50
        %p166 = pneg %p47
        %p167 = pneg %p71
        %p168 = pneg %p68
        %p169 = pneg %p92
        %p170 = pneg %p89
        %p171 = pneg %p120
        %p172 = pneg %p117
        %s173 = sand.u32 %s107, 1
        %s174 = scalar_lea.sflag [#allocation4], %s173
        %s175 = sand.u32 %s107, 1
        %s176 = smul.addr %s175, 128
        %s177 = scalar_lea.vmem [#allocation3], %s176
        %p178 = scmp.lt.s32.totalorder %s21, 1
        %s179 = scalar_select %p178, %s21, 1
        %s180 = smul.addr %s179, 30
        %s181 = smul.addr %s180, 8
        %s182 = scalar_lea.vmem %s0, %s181
        %s183 = smul.u32 8, %s22
        %s185 = smul.u32 %s22, 8
        %s186 = smul.u32 %s185, 24
        %s187 = scalar_lea.vmem %s182, %s186
        %v188 = vld [vmem:[%s187] sm:$0xff]
        %v189 = vld [vmem:[%s187 + $0x8] sm:$0xff]
        %v190 = vld [vmem:[%s187 + $0x18] sm:$0xff]
        %v191 = vld [vmem:[%s187 + $0x20] sm:$0xff]
        %v192 = vld [vmem:[%s187 + $0x30] sm:$0xff]
        %v193 = vld [vmem:[%s187 + $0x38] sm:$0xff]
        %v194 = vld [vmem:[%s187 + $0x48] sm:$0xff]
        %v195 = vld [vmem:[%s187 + $0x50] sm:$0xff]
        %v196 = vld [vmem:[%s187 + $0x60] sm:$0xff]
        %v197 = vld [vmem:[%s187 + $0x68] sm:$0xff]
        %v198 = vld [vmem:[%s187 + $0x78] sm:$0xff]
        %v199 = vld [vmem:[%s187 + $0x80] sm:$0xff]
        %v200 = vld [vmem:[%s187 + $0x90] sm:$0xff]
        %v201 = vld [vmem:[%s187 + $0x98] sm:$0xff]
        %v202 = vld [vmem:[%s187 + $0xa8] sm:$0xff]
        %v203 = vld [vmem:[%s187 + $0xb0] sm:$0xff]
        %v204 = vld [vmem:[%s187 + $0xc0] sm:$0xff]
        %v205 = vld [vmem:[%s187 + $0xc8] sm:$0xff]
        %v206 = vld [vmem:[%s187 + $0xd8] sm:$0xff]
        %v207 = vld [vmem:[%s187 + $0xe0] sm:$0xff]
        %v208 = vpack.c.bf16 %v189, %v188
        %v209 = vpack.c.bf16 %v191, %v190
        %v210 = vpack.c.bf16 %v193, %v192
        %v211 = vpack.c.bf16 %v195, %v194
        %v212 = vpack.c.bf16 %v197, %v196
        %v213 = vpack.c.bf16 %v199, %v198
        %v214 = vpack.c.bf16 %v201, %v200
        %v215 = vpack.c.bf16 %v203, %v202
        %v216 = vpack.c.bf16 %v205, %v204
        %v217 = vpack.c.bf16 %v207, %v206
        %218 = vst [vmem:[#allocation2] sm:$0xff] %v208
        %219 = vst [vmem:[#allocation2 + $0x18] sm:$0xff] %v209
        %220 = vst [vmem:[#allocation2 + $0x30] sm:$0xff] %v210
        %221 = vst [vmem:[#allocation2 + $0x48] sm:$0xff] %v211
        %222 = vst [vmem:[#allocation2 + $0x60] sm:$0xff] %v212
        %223 = vst [vmem:[#allocation2 + $0x78] sm:$0xff] %v213
        %224 = vst [vmem:[#allocation2 + $0x90] sm:$0xff] %v214
        %225 = vst [vmem:[#allocation2 + $0xa8] sm:$0xff] %v215
        %226 = vst [vmem:[#allocation2 + $0xc0] sm:$0xff] %v216
        %227 = vst [vmem:[#allocation2 + $0xd8] sm:$0xff] %v217
        %v228 = vld [vmem:[%s187 + $0x1] sm:$0xff]
        %v229 = vld [vmem:[%s187 + $0x9] sm:$0xff]
        %v230 = vld [vmem:[%s187 + $0x19] sm:$0xff]
        %v231 = vld [vmem:[%s187 + $0x21] sm:$0xff]
        %v232 = vld [vmem:[%s187 + $0x31] sm:$0xff]
        %v233 = vld [vmem:[%s187 + $0x39] sm:$0xff]
        %v234 = vld [vmem:[%s187 + $0x49] sm:$0xff]
        %v235 = vld [vmem:[%s187 + $0x51] sm:$0xff]
        %v236 = vld [vmem:[%s187 + $0x61] sm:$0xff]
        %v237 = vld [vmem:[%s187 + $0x69] sm:$0xff]
        %v238 = vld [vmem:[%s187 + $0x79] sm:$0xff]
        %v239 = vld [vmem:[%s187 + $0x81] sm:$0xff]
        %v240 = vld [vmem:[%s187 + $0x91] sm:$0xff]
        %v241 = vld [vmem:[%s187 + $0x99] sm:$0xff]
        %v242 = vld [vmem:[%s187 + $0xa9] sm:$0xff]
        %v243 = vld [vmem:[%s187 + $0xb1] sm:$0xff]
        %v244 = vld [vmem:[%s187 + $0xc1] sm:$0xff]
        %v245 = vld [vmem:[%s187 + $0xc9] sm:$0xff]
        %v246 = vld [vmem:[%s187 + $0xd9] sm:$0xff]
        %v247 = vld [vmem:[%s187 + $0xe1] sm:$0xff]
        %v248 = vpack.c.bf16 %v229, %v228
        %v249 = vpack.c.bf16 %v231, %v230
        %v250 = vpack.c.bf16 %v233, %v232
        %v251 = vpack.c.bf16 %v235, %v234
        %v252 = vpack.c.bf16 %v237, %v236
        %v253 = vpack.c.bf16 %v239, %v238
        %v254 = vpack.c.bf16 %v241, %v240
        %v255 = vpack.c.bf16 %v243, %v242
        %v256 = vpack.c.bf16 %v245, %v244
        %v257 = vpack.c.bf16 %v247, %v246
        %258 = vst [vmem:[#allocation2 + $0x8] sm:$0xff] %v248
        %259 = vst [vmem:[#allocation2 + $0x20] sm:$0xff] %v249
        %260 = vst [vmem:[#allocation2 + $0x38] sm:$0xff] %v250
        %261 = vst [vmem:[#allocation2 + $0x50] sm:$0xff] %v251
        %262 = vst [vmem:[#allocation2 + $0x68] sm:$0xff] %v252
        %263 = vst [vmem:[#allocation2 + $0x80] sm:$0xff] %v253
        %264 = vst [vmem:[#allocation2 + $0x98] sm:$0xff] %v254
        %265 = vst [vmem:[#allocation2 + $0xb0] sm:$0xff] %v255
        %266 = vst [vmem:[#allocation2 + $0xc8] sm:$0xff] %v256
        %267 = vst [vmem:[#allocation2 + $0xe0] sm:$0xff] %v257
        %v268 = vld [vmem:[%s187 + $0x2] sm:$0xff]
        %v269 = vld [vmem:[%s187 + $0xa] sm:$0xff]
        %v270 = vld [vmem:[%s187 + $0x1a] sm:$0xff]
        %v271 = vld [vmem:[%s187 + $0x22] sm:$0xff]
        %v272 = vld [vmem:[%s187 + $0x32] sm:$0xff]
        %v273 = vld [vmem:[%s187 + $0x3a] sm:$0xff]
        %v274 = vld [vmem:[%s187 + $0x4a] sm:$0xff]
        %v275 = vld [vmem:[%s187 + $0x52] sm:$0xff]
        %v276 = vld [vmem:[%s187 + $0x62] sm:$0xff]
        %v277 = vld [vmem:[%s187 + $0x6a] sm:$0xff]
        %v278 = vld [vmem:[%s187 + $0x7a] sm:$0xff]
        %v279 = vld [vmem:[%s187 + $0x82] sm:$0xff]
        %v280 = vld [vmem:[%s187 + $0x92] sm:$0xff]
        %v281 = vld [vmem:[%s187 + $0x9a] sm:$0xff]
        %v282 = vld [vmem:[%s187 + $0xaa] sm:$0xff]
        %v283 = vld [vmem:[%s187 + $0xb2] sm:$0xff]
        %v284 = vld [vmem:[%s187 + $0xc2] sm:$0xff]
        %v285 = vld [vmem:[%s187 + $0xca] sm:$0xff]
        %v286 = vld [vmem:[%s187 + $0xda] sm:$0xff]
        %v287 = vld [vmem:[%s187 + $0xe2] sm:$0xff]
        %v288 = vpack.c.bf16 %v269, %v268
        %v289 = vpack.c.bf16 %v271, %v270
        %v290 = vpack.c.bf16 %v273, %v272
        %v291 = vpack.c.bf16 %v275, %v274
        %v292 = vpack.c.bf16 %v277, %v276
        %v293 = vpack.c.bf16 %v279, %v278
        %v294 = vpack.c.bf16 %v281, %v280
        %v295 = vpack.c.bf16 %v283, %v282
        %v296 = vpack.c.bf16 %v285, %v284
        %v297 = vpack.c.bf16 %v287, %v286
        %298 = vst [vmem:[#allocation2 + $0x10] sm:$0xff] %v288
        %299 = vst [vmem:[#allocation2 + $0x28] sm:$0xff] %v289
        %300 = vst [vmem:[#allocation2 + $0x40] sm:$0xff] %v290
        %301 = vst [vmem:[#allocation2 + $0x58] sm:$0xff] %v291
        %302 = vst [vmem:[#allocation2 + $0x70] sm:$0xff] %v292
        %303 = vst [vmem:[#allocation2 + $0x88] sm:$0xff] %v293
        %304 = vst [vmem:[#allocation2 + $0xa0] sm:$0xff] %v294
        %305 = vst [vmem:[#allocation2 + $0xb8] sm:$0xff] %v295
        %306 = vst [vmem:[#allocation2 + $0xd0] sm:$0xff] %v296
        %307 = vst [vmem:[#allocation2 + $0xe8] sm:$0xff] %v297
        %v308 = vld [vmem:[#allocation2] sm:$0xff]
        %v309 = vld [vmem:[#allocation2 + $0x8] sm:$0xff]
        %v310 = vld [vmem:[#allocation2 + $0x10] sm:$0xff]
        %v311 = vld [vmem:[#allocation2 + $0x18] sm:$0xff]
        %v312 = vld [vmem:[#allocation2 + $0x20] sm:$0xff]
        %v313 = vld [vmem:[#allocation2 + $0x28] sm:$0xff]
        %v314 = vld [vmem:[#allocation2 + $0x30] sm:$0xff]
        %v315 = vld [vmem:[#allocation2 + $0x38] sm:$0xff]
        %v316 = vld [vmem:[#allocation2 + $0x40] sm:$0xff]
        %v317 = vld [vmem:[#allocation2 + $0x48] sm:$0xff]
        %v318 = vld [vmem:[#allocation2 + $0x50] sm:$0xff]
        %v319 = vld [vmem:[#allocation2 + $0x58] sm:$0xff]
        %v320 = vld [vmem:[#allocation2 + $0x60] sm:$0xff]
        %v321 = vld [vmem:[#allocation2 + $0x68] sm:$0xff]
        %v322 = vld [vmem:[#allocation2 + $0x70] sm:$0xff]
        %v323 = vld [vmem:[#allocation2 + $0x78] sm:$0xff]
        %v324 = vld [vmem:[#allocation2 + $0x80] sm:$0xff]
        %v325 = vld [vmem:[#allocation2 + $0x88] sm:$0xff]
        %v326 = vld [vmem:[#allocation2 + $0x90] sm:$0xff]
        %v327 = vld [vmem:[#allocation2 + $0x98] sm:$0xff]
        %v328 = vld [vmem:[#allocation2 + $0xa0] sm:$0xff]
        %v329 = vld [vmem:[#allocation2 + $0xa8] sm:$0xff]
        %v330 = vld [vmem:[#allocation2 + $0xb0] sm:$0xff]
        %v331 = vld [vmem:[#allocation2 + $0xb8] sm:$0xff]
        %v332 = vld [vmem:[%s1] sm:$0xf]
        %v333 = vld [vmem:[%s1 + $0x4] sm:$0xf]
        %v334 = vld [vmem:[%s1 + $0x8] sm:$0xf]
        %v335 = vld [vmem:[%s1 + $0xc] sm:$0xf]
        %v336 = vld [vmem:[%s1 + $0x10] sm:$0xf]
        %v337 = vld [vmem:[%s1 + $0x14] sm:$0xf]
        %v338 = vld [vmem:[%s1 + $0x18] sm:$0xf]
        %v339 = vld [vmem:[%s1 + $0x1c] sm:$0xf]
        %v340 = vld [vmem:[%s1 + $0x20] sm:$0xf]
        %v341 = vld [vmem:[%s1 + $0x24] sm:$0xf]
        %v342 = vld [vmem:[%s1 + $0x28] sm:$0xf]
        %v343 = vld [vmem:[%s1 + $0x2c] sm:$0xf]
        %v344 = vld [vmem:[%s1 + $0x30] sm:$0xf]
        %v345 = vld [vmem:[%s1 + $0x34] sm:$0xf]
        %v346 = vld [vmem:[%s1 + $0x38] sm:$0xf]
        %v347 = vld [vmem:[%s1 + $0x3c] sm:$0xf]
        %v348 = vld [vmem:[%s1 + $0x40] sm:$0xf]
        %v349 = vld [vmem:[%s1 + $0x44] sm:$0xf]
        %v350 = vld [vmem:[%s1 + $0x48] sm:$0xf]
        %v351 = vld [vmem:[%s1 + $0x4c] sm:$0xf]
        %v352 = vld [vmem:[%s1 + $0x50] sm:$0xf]
        %v353 = vld [vmem:[%s1 + $0x54] sm:$0xf]
        %v354 = vld [vmem:[%s1 + $0x58] sm:$0xf]
        %v355 = vld [vmem:[%s1 + $0x5c] sm:$0xf]
        %v356 = vld [vmem:[%s1 + $0x60] sm:$0xf]
        %v357 = vld [vmem:[%s1 + $0x64] sm:$0xf]
        %v358 = vld [vmem:[%s1 + $0x68] sm:$0xf]
        %v359 = vld [vmem:[%s1 + $0x6c] sm:$0xf]
        %v360 = vld [vmem:[%s1 + $0x70] sm:$0xf]
        %v361 = vld [vmem:[%s1 + $0x74] sm:$0xf]
        %v362 = vld [vmem:[%s1 + $0x78] sm:$0xf]
        %v363 = vld [vmem:[%s1 + $0x7c] sm:$0xf]
        %v364 = vld [vmem:[%s1 + $0x80] sm:$0xf]
        %v365 = vld [vmem:[%s1 + $0x84] sm:$0xf]
        %v366 = vld [vmem:[%s1 + $0x88] sm:$0xf]
        %v367 = vld [vmem:[%s1 + $0x8c] sm:$0xf]
        %v368 = vld [vmem:[%s1 + $0x90] sm:$0xf]
        %v369 = vld [vmem:[%s1 + $0x94] sm:$0xf]
        %v370 = vld [vmem:[%s1 + $0x98] sm:$0xf]
        %v371 = vld [vmem:[%s1 + $0x9c] sm:$0xf]
        %v372 = vld [vmem:[%s1 + $0xa0] sm:$0xf]
        %v373 = vld [vmem:[%s1 + $0xa4] sm:$0xf]
        %v374 = vld [vmem:[%s1 + $0xa8] sm:$0xf]
        %v375 = vld [vmem:[%s1 + $0xac] sm:$0xf]
        %v376 = vld [vmem:[%s1 + $0xb0] sm:$0xf]
        %v377 = vld [vmem:[%s1 + $0xb4] sm:$0xf]
        %v378 = vld [vmem:[%s1 + $0xb8] sm:$0xf]
        %v379 = vld [vmem:[%s1 + $0xbc] sm:$0xf]
        %s380 = scalar_lea.vmem [#allocation2], 24
        %v381 = vld [vmem:[%s380] sm:$0xff]
        %v382 = vld [vmem:[%s380 + $0x8] sm:$0xff]
        %v383 = vld [vmem:[%s380 + $0x10] sm:$0xff]
        %v384 = vld [vmem:[%s380 + $0x18] sm:$0xff]
        %v385 = vld [vmem:[%s380 + $0x20] sm:$0xff]
        %v386 = vld [vmem:[%s380 + $0x28] sm:$0xff]
        %v387 = vld [vmem:[%s380 + $0x30] sm:$0xff]
        %v388 = vld [vmem:[%s380 + $0x38] sm:$0xff]
        %v389 = vld [vmem:[%s380 + $0x40] sm:$0xff]
        %v390 = vld [vmem:[%s380 + $0x48] sm:$0xff]
        %v391 = vld [vmem:[%s380 + $0x50] sm:$0xff]
        %v392 = vld [vmem:[%s380 + $0x58] sm:$0xff]
        %v393 = vld [vmem:[%s380 + $0x60] sm:$0xff]
        %v394 = vld [vmem:[%s380 + $0x68] sm:$0xff]
        %v395 = vld [vmem:[%s380 + $0x70] sm:$0xff]
        %v396 = vld [vmem:[%s380 + $0x78] sm:$0xff]
        %v397 = vld [vmem:[%s380 + $0x80] sm:$0xff]
        %v398 = vld [vmem:[%s380 + $0x88] sm:$0xff]
        %v399 = vld [vmem:[%s380 + $0x90] sm:$0xff]
        %v400 = vld [vmem:[%s380 + $0x98] sm:$0xff]
        %v401 = vld [vmem:[%s380 + $0xa0] sm:$0xff]
        %v402 = vld [vmem:[%s380 + $0xa8] sm:$0xff]
        %v403 = vld [vmem:[%s380 + $0xb0] sm:$0xff]
        %v404 = vld [vmem:[%s380 + $0xb8] sm:$0xff]
        %s405 = scalar_lea.vmem %s1, 192
        %v406 = vld [vmem:[%s405] sm:$0xf]
        %v407 = vld [vmem:[%s405 + $0x4] sm:$0xf]
        %v408 = vld [vmem:[%s405 + $0x8] sm:$0xf]
        %v409 = vld [vmem:[%s405 + $0xc] sm:$0xf]
        %v410 = vld [vmem:[%s405 + $0x10] sm:$0xf]
        %v411 = vld [vmem:[%s405 + $0x14] sm:$0xf]
        %v412 = vld [vmem:[%s405 + $0x18] sm:$0xf]
        %v413 = vld [vmem:[%s405 + $0x1c] sm:$0xf]
        %v414 = vld [vmem:[%s405 + $0x20] sm:$0xf]
        %v415 = vld [vmem:[%s405 + $0x24] sm:$0xf]
        %v416 = vld [vmem:[%s405 + $0x28] sm:$0xf]
        %v417 = vld [vmem:[%s405 + $0x2c] sm:$0xf]
        %v418 = vld [vmem:[%s405 + $0x30] sm:$0xf]
        %v419 = vld [vmem:[%s405 + $0x34] sm:$0xf]
        %v420 = vld [vmem:[%s405 + $0x38] sm:$0xf]
        %v421 = vld [vmem:[%s405 + $0x3c] sm:$0xf]
        %v422 = vld [vmem:[%s405 + $0x40] sm:$0xf]
        %v423 = vld [vmem:[%s405 + $0x44] sm:$0xf]
        %v424 = vld [vmem:[%s405 + $0x48] sm:$0xf]
        %v425 = vld [vmem:[%s405 + $0x4c] sm:$0xf]
        %v426 = vld [vmem:[%s405 + $0x50] sm:$0xf]
        %v427 = vld [vmem:[%s405 + $0x54] sm:$0xf]
        %v428 = vld [vmem:[%s405 + $0x58] sm:$0xf]
        %v429 = vld [vmem:[%s405 + $0x5c] sm:$0xf]
        %v430 = vld [vmem:[%s405 + $0x60] sm:$0xf]
        %v431 = vld [vmem:[%s405 + $0x64] sm:$0xf]
        %v432 = vld [vmem:[%s405 + $0x68] sm:$0xf]
        %v433 = vld [vmem:[%s405 + $0x6c] sm:$0xf]
        %v434 = vld [vmem:[%s405 + $0x70] sm:$0xf]
        %v435 = vld [vmem:[%s405 + $0x74] sm:$0xf]
        %v436 = vld [vmem:[%s405 + $0x78] sm:$0xf]
        %v437 = vld [vmem:[%s405 + $0x7c] sm:$0xf]
        %v438 = vld [vmem:[%s405 + $0x80] sm:$0xf]
        %v439 = vld [vmem:[%s405 + $0x84] sm:$0xf]
        %v440 = vld [vmem:[%s405 + $0x88] sm:$0xf]
        %v441 = vld [vmem:[%s405 + $0x8c] sm:$0xf]
        %v442 = vld [vmem:[%s405 + $0x90] sm:$0xf]
        %v443 = vld [vmem:[%s405 + $0x94] sm:$0xf]
        %v444 = vld [vmem:[%s405 + $0x98] sm:$0xf]
        %v445 = vld [vmem:[%s405 + $0x9c] sm:$0xf]
        %v446 = vld [vmem:[%s405 + $0xa0] sm:$0xf]
        %v447 = vld [vmem:[%s405 + $0xa4] sm:$0xf]
        %v448 = vld [vmem:[%s405 + $0xa8] sm:$0xf]
        %v449 = vld [vmem:[%s405 + $0xac] sm:$0xf]
        %v450 = vld [vmem:[%s405 + $0xb0] sm:$0xf]
        %v451 = vld [vmem:[%s405 + $0xb4] sm:$0xf]
        %v452 = vld [vmem:[%s405 + $0xb8] sm:$0xf]
        %v453 = vld [vmem:[%s405 + $0xbc] sm:$0xf]
        %v502 = vunpack.c.l.b16 %v406
        %v503 = vunpack.c.l.b16 %v407
        %v504 = vunpack.c.l.b16 %v408
        %v505 = vunpack.c.l.b16 %v409
        %v506 = vunpack.c.l.b16 %v410
        %v507 = vunpack.c.l.b16 %v411
        %v508 = vunpack.c.l.b16 %v412
        %v509 = vunpack.c.l.b16 %v413
        %v510 = vunpack.c.l.b16 %v414
        %v511 = vunpack.c.l.b16 %v415
        %v512 = vunpack.c.l.b16 %v416
        %v513 = vunpack.c.l.b16 %v417
        %v514 = vunpack.c.l.b16 %v418
        %v515 = vunpack.c.l.b16 %v419
        %v516 = vunpack.c.l.b16 %v420
        %v517 = vunpack.c.l.b16 %v421
        %v518 = vunpack.c.l.b16 %v422
        %v519 = vunpack.c.l.b16 %v423
        %v520 = vunpack.c.l.b16 %v424
        %v521 = vunpack.c.l.b16 %v425
        %v522 = vunpack.c.l.b16 %v426
        %v523 = vunpack.c.l.b16 %v427
        %v524 = vunpack.c.l.b16 %v428
        %v525 = vunpack.c.l.b16 %v429
        %v526 = vunpack.c.l.b16 %v430
        %v527 = vunpack.c.l.b16 %v431
        %v528 = vunpack.c.l.b16 %v432
        %v529 = vunpack.c.l.b16 %v433
        %v530 = vunpack.c.l.b16 %v434
        %v531 = vunpack.c.l.b16 %v435
        %v532 = vunpack.c.l.b16 %v436
        %v533 = vunpack.c.l.b16 %v437
        %v534 = vunpack.c.l.b16 %v438
        %v535 = vunpack.c.l.b16 %v439
        %v536 = vunpack.c.l.b16 %v440
        %v537 = vunpack.c.l.b16 %v441
        %v538 = vunpack.c.l.b16 %v442
        %v539 = vunpack.c.l.b16 %v443
        %v540 = vunpack.c.l.b16 %v444
        %v541 = vunpack.c.l.b16 %v445
        %v542 = vunpack.c.l.b16 %v446
        %v543 = vunpack.c.l.b16 %v447
        %v544 = vunpack.c.l.b16 %v448
        %v545 = vunpack.c.l.b16 %v449
        %v546 = vunpack.c.l.b16 %v450
        %v547 = vunpack.c.l.b16 %v451
        %v548 = vunpack.c.l.b16 %v452
        %v549 = vunpack.c.l.b16 %v453
        %v550 = vpack.c.b16 %v503, %v502
        %v551 = vpack.c.b16 %v505, %v504
        %v552 = vpack.c.b16 %v507, %v506
        %v553 = vpack.c.b16 %v509, %v508
        %v554 = vpack.c.b16 %v511, %v510
        %v555 = vpack.c.b16 %v513, %v512
        %v556 = vpack.c.b16 %v515, %v514
        %v557 = vpack.c.b16 %v517, %v516
        %v558 = vpack.c.b16 %v519, %v518
        %v559 = vpack.c.b16 %v521, %v520
        %v560 = vpack.c.b16 %v523, %v522
        %v561 = vpack.c.b16 %v525, %v524
        %v562 = vpack.c.b16 %v527, %v526
        %v563 = vpack.c.b16 %v529, %v528
        %v564 = vpack.c.b16 %v531, %v530
        %v565 = vpack.c.b16 %v533, %v532
        %v566 = vpack.c.b16 %v535, %v534
        %v567 = vpack.c.b16 %v537, %v536
        %v568 = vpack.c.b16 %v539, %v538
        %v569 = vpack.c.b16 %v541, %v540
        %v570 = vpack.c.b16 %v543, %v542
        %v571 = vpack.c.b16 %v545, %v544
        %v572 = vpack.c.b16 %v547, %v546
        %v573 = vpack.c.b16 %v549, %v548
        %598 = vmatprep.subr.bf16.mxu0 0
        %599 = vmatpush1.bf16.msra.mxu0 %v550
        %600 = vmatprep.subr.bf16.mxu0 0
        %601 = vmatpush1.bf16.msra.mxu0 %v551
        %602 = vmatprep.subr.bf16.mxu0 0
        %603 = vmatpush1.bf16.msra.mxu0 %v552
        %604 = vmatprep.subr.bf16.mxu0 0
        %605 = vmatpush1.bf16.msra.mxu0 %v553
        %606 = vmatprep.subr.bf16.mxu0 0
        %607 = vmatpush1.bf16.msra.mxu0 %v554
        %608 = vmatprep.subr.bf16.mxu0 0
        %609 = vmatpush1.bf16.msra.mxu0 %v555
        %610 = vmatprep.subr.bf16.mxu0 0
        %611 = vmatpush1.bf16.msra.mxu0 %v556
        %612 = vmatprep.subr.bf16.mxu0 0
        %613 = vmatpush1.bf16.msra.mxu0 %v557
        %614 = vmatprep.subr.bf16.mxu0 0
        %615 = vmatpush1.bf16.msra.mxu0 %v558
        %616 = vmatprep.subr.bf16.mxu0 0
        %617 = vmatpush1.bf16.msra.mxu0 %v559
        %618 = vmatprep.subr.bf16.mxu0 0
        %619 = vmatpush1.bf16.msra.mxu0 %v560
        %620 = vmatprep.subr.bf16.mxu0 0
        %621 = vmatpush1.bf16.msra.mxu0 %v561
        %622 = vmatprep.subr.bf16.mxu0 0
        %623 = vmatpush1.bf16.msra.mxu0 %v562
        %624 = vmatprep.subr.bf16.mxu0 0
        %625 = vmatpush1.bf16.msra.mxu0 %v563
        %626 = vmatprep.subr.bf16.mxu0 0
        %627 = vmatpush1.bf16.msra.mxu0 %v564
        %628 = vmatprep.subr.bf16.mxu0 0
        %629 = vmatpush1.bf16.msra.mxu0 %v565
        %630 = vmatprep.mubr.bf16.mxu0 %v382
        %631 = vmatmul.mubr.bf16.gmra.mrb[0].mxu0 %v381
        %v632 = vpop.f32.mrb[0].mxu0
        %v633 = vadd.f32 0.0, %v632
        %v634 = vpop.f32.mrb[0].mxu0
        %v635 = vpop.f32.mrb[0].mxu0
        %v636 = vadd.f32 0.0, %v635
        %v637 = vpop.f32.mrb[0].mxu0
        %638 = vmatprep.mubr.bf16.mxu0 %v385
        %639 = vmatmul.mubr.bf16.gmra.mrb[0].mxu0 %v384
        %v640 = vpop.f32.mrb[0].mxu0
        %v641 = vadd.f32 0.0, %v640
        %v642 = vpop.f32.mrb[0].mxu0
        %v643 = vpop.f32.mrb[0].mxu0
        %v644 = vadd.f32 0.0, %v643
        %v645 = vpop.f32.mrb[0].mxu0
        %646 = vmatprep.mubr.bf16.mxu0 %v388
        %647 = vmatmul.mubr.bf16.gmra.mrb[0].mxu0 %v387
        %v648 = vpop.f32.mrb[0].mxu0
        %v649 = vadd.f32 0.0, %v648
        %v650 = vpop.f32.mrb[0].mxu0
        %v651 = vpop.f32.mrb[0].mxu0
        %v652 = vadd.f32 0.0, %v651
        %v653 = vpop.f32.mrb[0].mxu0
        %654 = vmatprep.mubr.bf16.mxu0 %v391
        %655 = vmatmul.mubr.bf16.gmra.mrb[0].mxu0 %v390
        %v656 = vpop.f32.mrb[0].mxu0
        %v657 = vadd.f32 0.0, %v656
        %v658 = vpop.f32.mrb[0].mxu0
        %v659 = vpop.f32.mrb[0].mxu0
        %v660 = vadd.f32 0.0, %v659
        %v661 = vpop.f32.mrb[0].mxu0
        %662 = vmatprep.mubr.bf16.mxu0 %v394
        %663 = vmatmul.mubr.bf16.gmra.mrb[0].mxu0 %v393
        %v664 = vpop.f32.mrb[0].mxu0
        %v665 = vadd.f32 0.0, %v664
        %v666 = vpop.f32.mrb[0].mxu0
        %v667 = vpop.f32.mrb[0].mxu0
        %v668 = vadd.f32 0.0, %v667
        %v669 = vpop.f32.mrb[0].mxu0
        %670 = vmatprep.mubr.bf16.mxu0 %v397
        %671 = vmatmul.mubr.bf16.gmra.mrb[0].mxu0 %v396
        %v672 = vpop.f32.mrb[0].mxu0
        %v673 = vadd.f32 0.0, %v672
        %v674 = vpop.f32.mrb[0].mxu0
        %v675 = vpop.f32.mrb[0].mxu0
        %v676 = vadd.f32 0.0, %v675
        %v677 = vpop.f32.mrb[0].mxu0
        %678 = vmatprep.mubr.bf16.mxu0 %v400
        %679 = vmatmul.mubr.bf16.gmra.mrb[0].mxu0 %v399
        %v680 = vpop.f32.mrb[0].mxu0
        %v681 = vadd.f32 0.0, %v680
        %v682 = vpop.f32.mrb[0].mxu0
        %v683 = vpop.f32.mrb[0].mxu0
        %v684 = vadd.f32 0.0, %v683
        %v685 = vpop.f32.mrb[0].mxu0
        %686 = vmatprep.mubr.bf16.mxu0 %v403
        %687 = vmatmul.mubr.bf16.gmra.mrb[0].mxu0 %v402
        %v688 = vpop.f32.mrb[0].mxu0
        %v689 = vadd.f32 0.0, %v688
        %v690 = vpop.f32.mrb[0].mxu0
        %v691 = vpop.f32.mrb[0].mxu0
        %v692 = vadd.f32 0.0, %v691
        %v693 = vpop.f32.mrb[0].mxu0
        %694 = vdwg.mxu0
        %695 = vmatprep.subr.bf16.mxu0 0
        %696 = vmatpush1.bf16.msra.mxu0 %v566
        %697 = vmatprep.subr.bf16.mxu0 0
        %698 = vmatpush1.bf16.msra.mxu0 %v567
        %699 = vmatprep.subr.bf16.mxu0 0
        %700 = vmatpush1.bf16.msra.mxu0 %v568
        %701 = vmatprep.subr.bf16.mxu0 0
        %702 = vmatpush1.bf16.msra.mxu0 %v569
        %703 = vmatprep.subr.bf16.mxu0 0
        %704 = vmatpush1.bf16.msra.mxu0 %v570
        %705 = vmatprep.subr.bf16.mxu0 0
        %706 = vmatpush1.bf16.msra.mxu0 %v571
        %707 = vmatprep.subr.bf16.mxu0 0
        %708 = vmatpush1.bf16.msra.mxu0 %v572
        %709 = vmatprep.subr.bf16.mxu0 0
        %710 = vmatpush1.bf16.msra.mxu0 %v573
        %711 = vmatprep.subr.bf16.mxu0 0
        %712 = vmatpush1.bf16.msra.mxu0 0
        %713 = vmatprep.subr.bf16.mxu0 0
        %714 = vmatpush1.bf16.msra.mxu0 0
        %715 = vmatprep.subr.bf16.mxu0 0
        %716 = vmatpush1.bf16.msra.mxu0 0
        %717 = vmatprep.subr.bf16.mxu0 0
        %718 = vmatpush1.bf16.msra.mxu0 0
        %719 = vmatprep.subr.bf16.mxu0 0
        %720 = vmatpush1.bf16.msra.mxu0 0
        %721 = vmatprep.subr.bf16.mxu0 0
        %722 = vmatpush1.bf16.msra.mxu0 0
        %723 = vmatprep.subr.bf16.mxu0 0
        %724 = vmatpush1.bf16.msra.mxu0 0
        %725 = vmatprep.subr.bf16.mxu0 0
        %726 = vmatpush1.bf16.msra.mxu0 0
        %727 = vmatprep.mubr.bf16.mxu0 0
        %728 = vmatmul.mubr.bf16.gmra.mrb[0].mxu0 %v383
        %v729 = vpop.f32.mrb[0].mxu0
        %v730 = vadd.f32 %v633, %v729
        %v731 = vpop.f32.mrb[0].mxu0
        %v732 = vpop.f32.mrb[0].mxu0
        %v733 = vadd.f32 %v636, %v732
        %v734 = vpop.f32.mrb[0].mxu0
        %735 = vmatprep.mubr.bf16.mxu0 0
        %736 = vmatmul.mubr.bf16.gmra.mrb[0].mxu0 %v386
        %v737 = vpop.f32.mrb[0].mxu0
        %v738 = vadd.f32 %v641, %v737
        %v739 = vpop.f32.mrb[0].mxu0
        %v740 = vpop.f32.mrb[0].mxu0
        %v741 = vadd.f32 %v644, %v740
        %v742 = vpop.f32.mrb[0].mxu0
        %743 = vmatprep.mubr.bf16.mxu0 0
        %744 = vmatmul.mubr.bf16.gmra.mrb[0].mxu0 %v389
        %v745 = vpop.f32.mrb[0].mxu0
        %v746 = vadd.f32 %v649, %v745
        %v747 = vpop.f32.mrb[0].mxu0
        %v748 = vpop.f32.mrb[0].mxu0
        %v749 = vadd.f32 %v652, %v748
        %v750 = vpop.f32.mrb[0].mxu0
        %751 = vmatprep.mubr.bf16.mxu0 0
        %752 = vmatmul.mubr.bf16.gmra.mrb[0].mxu0 %v392
        %v753 = vpop.f32.mrb[0].mxu0
        %v754 = vadd.f32 %v657, %v753
        %v755 = vpop.f32.mrb[0].mxu0
        %v756 = vpop.f32.mrb[0].mxu0
        %v757 = vadd.f32 %v660, %v756
        %v758 = vpop.f32.mrb[0].mxu0
        %759 = vmatprep.mubr.bf16.mxu0 0
        %760 = vmatmul.mubr.bf16.gmra.mrb[0].mxu0 %v395
        %v761 = vpop.f32.mrb[0].mxu0
        %v762 = vadd.f32 %v665, %v761
        %v763 = vpop.f32.mrb[0].mxu0
        %v764 = vpop.f32.mrb[0].mxu0
        %v765 = vadd.f32 %v668, %v764
        %v766 = vpop.f32.mrb[0].mxu0
        %767 = vmatprep.mubr.bf16.mxu0 0
        %768 = vmatmul.mubr.bf16.gmra.mrb[0].mxu0 %v398
        %v769 = vpop.f32.mrb[0].mxu0
        %v770 = vadd.f32 %v673, %v769
        %v771 = vpop.f32.mrb[0].mxu0
        %v772 = vpop.f32.mrb[0].mxu0
        %v773 = vadd.f32 %v676, %v772
        %v774 = vpop.f32.mrb[0].mxu0
        %775 = vmatprep.mubr.bf16.mxu0 0
        %776 = vmatmul.mubr.bf16.gmra.mrb[0].mxu0 %v401
        %v777 = vpop.f32.mrb[0].mxu0
        %v778 = vadd.f32 %v681, %v777
        %v779 = vpop.f32.mrb[0].mxu0
        %v780 = vpop.f32.mrb[0].mxu0
        %v781 = vadd.f32 %v684, %v780
        %v782 = vpop.f32.mrb[0].mxu0
        %783 = vmatprep.mubr.bf16.mxu0 0
        %784 = vmatmul.mubr.bf16.gmra.mrb[0].mxu0 %v404
        %v785 = vpop.f32.mrb[0].mxu0
        %v786 = vadd.f32 %v689, %v785
        %v787 = vpop.f32.mrb[0].mxu0
        %v788 = vpop.f32.mrb[0].mxu0
        %v789 = vadd.f32 %v692, %v788
        %v790 = vpop.f32.mrb[0].mxu0
        %791 = vdwg.mxu0
        %v840 = vunpack.c.l.b16 %v332
        %v841 = vunpack.c.l.b16 %v333
        %v842 = vunpack.c.l.b16 %v334
        %v843 = vunpack.c.l.b16 %v335
        %v844 = vunpack.c.l.b16 %v336
        %v845 = vunpack.c.l.b16 %v337
        %v846 = vunpack.c.l.b16 %v338
        %v847 = vunpack.c.l.b16 %v339
        %v848 = vunpack.c.l.b16 %v340
        %v849 = vunpack.c.l.b16 %v341
        %v850 = vunpack.c.l.b16 %v342
        %v851 = vunpack.c.l.b16 %v343
        %v852 = vunpack.c.l.b16 %v344
        %v853 = vunpack.c.l.b16 %v345
        %v854 = vunpack.c.l.b16 %v346
        %v855 = vunpack.c.l.b16 %v347
        %v856 = vunpack.c.l.b16 %v348
        %v857 = vunpack.c.l.b16 %v349
        %v858 = vunpack.c.l.b16 %v350
        %v859 = vunpack.c.l.b16 %v351
        %v860 = vunpack.c.l.b16 %v352
        %v861 = vunpack.c.l.b16 %v353
        %v862 = vunpack.c.l.b16 %v354
        %v863 = vunpack.c.l.b16 %v355
        %v864 = vunpack.c.l.b16 %v356
        %v865 = vunpack.c.l.b16 %v357
        %v866 = vunpack.c.l.b16 %v358
        %v867 = vunpack.c.l.b16 %v359
        %v868 = vunpack.c.l.b16 %v360
        %v869 = vunpack.c.l.b16 %v361
        %v870 = vunpack.c.l.b16 %v362
        %v871 = vunpack.c.l.b16 %v363
        %v872 = vunpack.c.l.b16 %v364
        %v873 = vunpack.c.l.b16 %v365
        %v874 = vunpack.c.l.b16 %v366
        %v875 = vunpack.c.l.b16 %v367
        %v876 = vunpack.c.l.b16 %v368
        %v877 = vunpack.c.l.b16 %v369
        %v878 = vunpack.c.l.b16 %v370
        %v879 = vunpack.c.l.b16 %v371
        %v880 = vunpack.c.l.b16 %v372
        %v881 = vunpack.c.l.b16 %v373
        %v882 = vunpack.c.l.b16 %v374
        %v883 = vunpack.c.l.b16 %v375
        %v884 = vunpack.c.l.b16 %v376
        %v885 = vunpack.c.l.b16 %v377
        %v886 = vunpack.c.l.b16 %v378
        %v887 = vunpack.c.l.b16 %v379
        %v888 = vpack.c.b16 %v841, %v840
        %v889 = vpack.c.b16 %v843, %v842
        %v890 = vpack.c.b16 %v845, %v844
        %v891 = vpack.c.b16 %v847, %v846
        %v892 = vpack.c.b16 %v849, %v848
        %v893 = vpack.c.b16 %v851, %v850
        %v894 = vpack.c.b16 %v853, %v852
        %v895 = vpack.c.b16 %v855, %v854
        %v896 = vpack.c.b16 %v857, %v856
        %v897 = vpack.c.b16 %v859, %v858
        %v898 = vpack.c.b16 %v861, %v860
        %v899 = vpack.c.b16 %v863, %v862
        %v900 = vpack.c.b16 %v865, %v864
        %v901 = vpack.c.b16 %v867, %v866
        %v902 = vpack.c.b16 %v869, %v868
        %v903 = vpack.c.b16 %v871, %v870
        %v904 = vpack.c.b16 %v873, %v872
        %v905 = vpack.c.b16 %v875, %v874
        %v906 = vpack.c.b16 %v877, %v876
        %v907 = vpack.c.b16 %v879, %v878
        %v908 = vpack.c.b16 %v881, %v880
        %v909 = vpack.c.b16 %v883, %v882
        %v910 = vpack.c.b16 %v885, %v884
        %v911 = vpack.c.b16 %v887, %v886
        %936 = vmatprep.subr.bf16.mxu0 0
        %937 = vmatpush1.bf16.msra.mxu0 %v888
        %938 = vmatprep.subr.bf16.mxu0 0
        %939 = vmatpush1.bf16.msra.mxu0 %v889
        %940 = vmatprep.subr.bf16.mxu0 0
        %941 = vmatpush1.bf16.msra.mxu0 %v890
        %942 = vmatprep.subr.bf16.mxu0 0
        %943 = vmatpush1.bf16.msra.mxu0 %v891
        %944 = vmatprep.subr.bf16.mxu0 0
        %945 = vmatpush1.bf16.msra.mxu0 %v892
        %946 = vmatprep.subr.bf16.mxu0 0
        %947 = vmatpush1.bf16.msra.mxu0 %v893
        %948 = vmatprep.subr.bf16.mxu0 0
        %949 = vmatpush1.bf16.msra.mxu0 %v894
        %950 = vmatprep.subr.bf16.mxu0 0
        %951 = vmatpush1.bf16.msra.mxu0 %v895
        %952 = vmatprep.subr.bf16.mxu0 0
        %953 = vmatpush1.bf16.msra.mxu0 %v896
        %954 = vmatprep.subr.bf16.mxu0 0
        %955 = vmatpush1.bf16.msra.mxu0 %v897
        %956 = vmatprep.subr.bf16.mxu0 0
        %957 = vmatpush1.bf16.msra.mxu0 %v898
        %958 = vmatprep.subr.bf16.mxu0 0
        %959 = vmatpush1.bf16.msra.mxu0 %v899
        %960 = vmatprep.subr.bf16.mxu0 0
        %961 = vmatpush1.bf16.msra.mxu0 %v900
        %962 = vmatprep.subr.bf16.mxu0 0
        %963 = vmatpush1.bf16.msra.mxu0 %v901
        %964 = vmatprep.subr.bf16.mxu0 0
        %965 = vmatpush1.bf16.msra.mxu0 %v902
        %966 = vmatprep.subr.bf16.mxu0 0
        %967 = vmatpush1.bf16.msra.mxu0 %v903
        %968 = vmatprep.mubr.bf16.mxu0 %v309
        %969 = vmatmul.mubr.bf16.gmra.mrb[0].mxu0 %v308
        %v970 = vpop.f32.mrb[0].mxu0
        %v971 = vadd.f32 %v730, %v970
        %v972 = vpop.f32.mrb[0].mxu0
        %v973 = vpop.f32.mrb[0].mxu0
        %v974 = vadd.f32 %v733, %v973
        %v975 = vpop.f32.mrb[0].mxu0
        %976 = vmatprep.mubr.bf16.mxu0 %v312
        %977 = vmatmul.mubr.bf16.gmra.mrb[0].mxu0 %v311
        %v978 = vpop.f32.mrb[0].mxu0
        %v979 = vadd.f32 %v738, %v978
        %v980 = vpop.f32.mrb[0].mxu0
        %v981 = vpop.f32.mrb[0].mxu0
        %v982 = vadd.f32 %v741, %v981
        %v983 = vpop.f32.mrb[0].mxu0
        %984 = vmatprep.mubr.bf16.mxu0 %v315
        %985 = vmatmul.mubr.bf16.gmra.mrb[0].mxu0 %v314
        %v986 = vpop.f32.mrb[0].mxu0
        %v987 = vadd.f32 %v746, %v986
        %v988 = vpop.f32.mrb[0].mxu0
        %v989 = vpop.f32.mrb[0].mxu0
        %v990 = vadd.f32 %v749, %v989
        %v991 = vpop.f32.mrb[0].mxu0
        %992 = vmatprep.mubr.bf16.mxu0 %v318
        %993 = vmatmul.mubr.bf16.gmra.mrb[0].mxu0 %v317
        %v994 = vpop.f32.mrb[0].mxu0
        %v995 = vadd.f32 %v754, %v994
        %v996 = vpop.f32.mrb[0].mxu0
        %v997 = vpop.f32.mrb[0].mxu0
        %v998 = vadd.f32 %v757, %v997
        %v999 = vpop.f32.mrb[0].mxu0
        %1000 = vmatprep.mubr.bf16.mxu0 %v321
        %1001 = vmatmul.mubr.bf16.gmra.mrb[0].mxu0 %v320
        %v1002 = vpop.f32.mrb[0].mxu0
        %v1003 = vadd.f32 %v762, %v1002
        %v1004 = vpop.f32.mrb[0].mxu0
        %v1005 = vpop.f32.mrb[0].mxu0
        %v1006 = vadd.f32 %v765, %v1005
        %v1007 = vpop.f32.mrb[0].mxu0
        %1008 = vmatprep.mubr.bf16.mxu0 %v324
        %1009 = vmatmul.mubr.bf16.gmra.mrb[0].mxu0 %v323
        %v1010 = vpop.f32.mrb[0].mxu0
        %v1011 = vadd.f32 %v770, %v1010
        %v1012 = vpop.f32.mrb[0].mxu0
        %v1013 = vpop.f32.mrb[0].mxu0
        %v1014 = vadd.f32 %v773, %v1013
        %v1015 = vpop.f32.mrb[0].mxu0
        %1016 = vmatprep.mubr.bf16.mxu0 %v327
        %1017 = vmatmul.mubr.bf16.gmra.mrb[0].mxu0 %v326
        %v1018 = vpop.f32.mrb[0].mxu0
        %v1019 = vadd.f32 %v778, %v1018
        %v1020 = vpop.f32.mrb[0].mxu0
        %v1021 = vpop.f32.mrb[0].mxu0
        %v1022 = vadd.f32 %v781, %v1021
        %v1023 = vpop.f32.mrb[0].mxu0
        %1024 = vmatprep.mubr.bf16.mxu0 %v330
        %1025 = vmatmul.mubr.bf16.gmra.mrb[0].mxu0 %v329
        %v1026 = vpop.f32.mrb[0].mxu0
        %v1027 = vadd.f32 %v786, %v1026
        %v1028 = vpop.f32.mrb[0].mxu0
        %v1029 = vpop.f32.mrb[0].mxu0
        %v1030 = vadd.f32 %v789, %v1029
        %v1031 = vpop.f32.mrb[0].mxu0
        %1032 = vdwg.mxu0
        %1033 = vmatprep.subr.bf16.mxu0 0
        %1034 = vmatpush1.bf16.msra.mxu0 %v904
        %1035 = vmatprep.subr.bf16.mxu0 0
        %1036 = vmatpush1.bf16.msra.mxu0 %v905
        %1037 = vmatprep.subr.bf16.mxu0 0
        %1038 = vmatpush1.bf16.msra.mxu0 %v906
        %1039 = vmatprep.subr.bf16.mxu0 0
        %1040 = vmatpush1.bf16.msra.mxu0 %v907
        %1041 = vmatprep.subr.bf16.mxu0 0
        %1042 = vmatpush1.bf16.msra.mxu0 %v908
        %1043 = vmatprep.subr.bf16.mxu0 0
        %1044 = vmatpush1.bf16.msra.mxu0 %v909
        %1045 = vmatprep.subr.bf16.mxu0 0
        %1046 = vmatpush1.bf16.msra.mxu0 %v910
        %1047 = vmatprep.subr.bf16.mxu0 0
        %1048 = vmatpush1.bf16.msra.mxu0 %v911
        %1049 = vmatprep.subr.bf16.mxu0 0
        %1050 = vmatpush1.bf16.msra.mxu0 0
        %1051 = vmatprep.subr.bf16.mxu0 0
        %1052 = vmatpush1.bf16.msra.mxu0 0
        %1053 = vmatprep.subr.bf16.mxu0 0
        %1054 = vmatpush1.bf16.msra.mxu0 0
        %1055 = vmatprep.subr.bf16.mxu0 0
        %1056 = vmatpush1.bf16.msra.mxu0 0
        %1057 = vmatprep.subr.bf16.mxu0 0
        %1058 = vmatpush1.bf16.msra.mxu0 0
        %1059 = vmatprep.subr.bf16.mxu0 0
        %1060 = vmatpush1.bf16.msra.mxu0 0
        %1061 = vmatprep.subr.bf16.mxu0 0
        %1062 = vmatpush1.bf16.msra.mxu0 0
        %1063 = vmatprep.subr.bf16.mxu0 0
        %1064 = vmatpush1.bf16.msra.mxu0 0
        %1065 = vmatprep.mubr.bf16.mxu0 0
        %1066 = vmatmul.mubr.bf16.gmra.mrb[0].mxu0 %v310
        %v1067 = vpop.f32.mrb[0].mxu0
        %v1068 = vadd.f32 %v971, %v1067
        %v1069 = vpop.f32.mrb[0].mxu0
        %v1070 = vpop.f32.mrb[0].mxu0
        %v1071 = vadd.f32 %v974, %v1070
        %v1072 = vpop.f32.mrb[0].mxu0
        %1073 = vmatprep.mubr.bf16.mxu0 0
        %1074 = vmatmul.mubr.bf16.gmra.mrb[0].mxu0 %v313
        %v1075 = vpop.f32.mrb[0].mxu0
        %v1076 = vadd.f32 %v979, %v1075
        %v1077 = vpop.f32.mrb[0].mxu0
        %v1078 = vpop.f32.mrb[0].mxu0
        %v1079 = vadd.f32 %v982, %v1078
        %v1080 = vpop.f32.mrb[0].mxu0
        %1081 = vmatprep.mubr.bf16.mxu0 0
        %1082 = vmatmul.mubr.bf16.gmra.mrb[0].mxu0 %v316
        %v1083 = vpop.f32.mrb[0].mxu0
        %v1084 = vadd.f32 %v987, %v1083
        %v1085 = vpop.f32.mrb[0].mxu0
        %v1086 = vpop.f32.mrb[0].mxu0
        %v1087 = vadd.f32 %v990, %v1086
        %v1088 = vpop.f32.mrb[0].mxu0
        %1089 = vmatprep.mubr.bf16.mxu0 0
        %1090 = vmatmul.mubr.bf16.gmra.mrb[0].mxu0 %v319
        %v1091 = vpop.f32.mrb[0].mxu0
        %v1092 = vadd.f32 %v995, %v1091
        %v1093 = vpop.f32.mrb[0].mxu0
        %v1094 = vpop.f32.mrb[0].mxu0
        %v1095 = vadd.f32 %v998, %v1094
        %v1096 = vpop.f32.mrb[0].mxu0
        %1097 = vmatprep.mubr.bf16.mxu0 0
        %1098 = vmatmul.mubr.bf16.gmra.mrb[0].mxu0 %v322
        %v1099 = vpop.f32.mrb[0].mxu0
        %v1100 = vadd.f32 %v1003, %v1099
        %v1101 = vpop.f32.mrb[0].mxu0
        %v1102 = vpop.f32.mrb[0].mxu0
        %v1103 = vadd.f32 %v1006, %v1102
        %v1104 = vpop.f32.mrb[0].mxu0
        %1105 = vmatprep.mubr.bf16.mxu0 0
        %1106 = vmatmul.mubr.bf16.gmra.mrb[0].mxu0 %v325
        %v1107 = vpop.f32.mrb[0].mxu0
        %v1108 = vadd.f32 %v1011, %v1107
        %v1109 = vpop.f32.mrb[0].mxu0
        %v1110 = vpop.f32.mrb[0].mxu0
        %v1111 = vadd.f32 %v1014, %v1110
        %v1112 = vpop.f32.mrb[0].mxu0
        %1113 = vmatprep.mubr.bf16.mxu0 0
        %1114 = vmatmul.mubr.bf16.gmra.mrb[0].mxu0 %v328
        %v1115 = vpop.f32.mrb[0].mxu0
        %v1116 = vadd.f32 %v1019, %v1115
        %v1117 = vpop.f32.mrb[0].mxu0
        %v1118 = vpop.f32.mrb[0].mxu0
        %v1119 = vadd.f32 %v1022, %v1118
        %v1120 = vpop.f32.mrb[0].mxu0
        %1121 = vmatprep.mubr.bf16.mxu0 0
        %1122 = vmatmul.mubr.bf16.gmra.mrb[0].mxu0 %v331
        %v1123 = vpop.f32.mrb[0].mxu0
        %v1124 = vadd.f32 %v1027, %v1123
        %v1125 = vpop.f32.mrb[0].mxu0
        %v1126 = vpop.f32.mrb[0].mxu0
        %v1127 = vadd.f32 %v1030, %v1126
        %v1128 = vpop.f32.mrb[0].mxu0
        %1129 = vdwg.mxu0
        %s1130 = scalar_lea.vmem [#allocation2], 48
        %v1131 = vld [vmem:[%s1130] sm:$0xff]
        %v1132 = vld [vmem:[%s1130 + $0x8] sm:$0xff]
        %v1133 = vld [vmem:[%s1130 + $0x10] sm:$0xff]
        %v1134 = vld [vmem:[%s1130 + $0x18] sm:$0xff]
        %v1135 = vld [vmem:[%s1130 + $0x20] sm:$0xff]
        %v1136 = vld [vmem:[%s1130 + $0x28] sm:$0xff]
        %v1137 = vld [vmem:[%s1130 + $0x30] sm:$0xff]
        %v1138 = vld [vmem:[%s1130 + $0x38] sm:$0xff]
        %v1139 = vld [vmem:[%s1130 + $0x40] sm:$0xff]
        %v1140 = vld [vmem:[%s1130 + $0x48] sm:$0xff]
        %v1141 = vld [vmem:[%s1130 + $0x50] sm:$0xff]
        %v1142 = vld [vmem:[%s1130 + $0x58] sm:$0xff]
        %v1143 = vld [vmem:[%s1130 + $0x60] sm:$0xff]
        %v1144 = vld [vmem:[%s1130 + $0x68] sm:$0xff]
        %v1145 = vld [vmem:[%s1130 + $0x70] sm:$0xff]
        %v1146 = vld [vmem:[%s1130 + $0x78] sm:$0xff]
        %v1147 = vld [vmem:[%s1130 + $0x80] sm:$0xff]
        %v1148 = vld [vmem:[%s1130 + $0x88] sm:$0xff]
        %v1149 = vld [vmem:[%s1130 + $0x90] sm:$0xff]
        %v1150 = vld [vmem:[%s1130 + $0x98] sm:$0xff]
        %v1151 = vld [vmem:[%s1130 + $0xa0] sm:$0xff]
        %v1152 = vld [vmem:[%s1130 + $0xa8] sm:$0xff]
        %v1153 = vld [vmem:[%s1130 + $0xb0] sm:$0xff]
        %v1154 = vld [vmem:[%s1130 + $0xb8] sm:$0xff]
        %s1155 = scalar_lea.vmem %s1, 384
        %v1156 = vld [vmem:[%s1155] sm:$0xf]
        %v1157 = vld [vmem:[%s1155 + $0x4] sm:$0xf]
        %v1158 = vld [vmem:[%s1155 + $0x8] sm:$0xf]
        %v1159 = vld [vmem:[%s1155 + $0xc] sm:$0xf]
        %v1160 = vld [vmem:[%s1155 + $0x10] sm:$0xf]
        %v1161 = vld [vmem:[%s1155 + $0x14] sm:$0xf]
        %v1162 = vld [vmem:[%s1155 + $0x18] sm:$0xf]
        %v1163 = vld [vmem:[%s1155 + $0x1c] sm:$0xf]
        %v1164 = vld [vmem:[%s1155 + $0x20] sm:$0xf]
        %v1165 = vld [vmem:[%s1155 + $0x24] sm:$0xf]
        %v1166 = vld [vmem:[%s1155 + $0x28] sm:$0xf]
        %v1167 = vld [vmem:[%s1155 + $0x2c] sm:$0xf]
        %v1168 = vld [vmem:[%s1155 + $0x30] sm:$0xf]
        %v1169 = vld [vmem:[%s1155 + $0x34] sm:$0xf]
        %v1170 = vld [vmem:[%s1155 + $0x38] sm:$0xf]
        %v1171 = vld [vmem:[%s1155 + $0x3c] sm:$0xf]
        %v1172 = vld [vmem:[%s1155 + $0x40] sm:$0xf]
        %v1173 = vld [vmem:[%s1155 + $0x44] sm:$0xf]
        %v1174 = vld [vmem:[%s1155 + $0x48] sm:$0xf]
        %v1175 = vld [vmem:[%s1155 + $0x4c] sm:$0xf]
        %v1176 = vld [vmem:[%s1155 + $0x50] sm:$0xf]
        %v1177 = vld [vmem:[%s1155 + $0x54] sm:$0xf]
        %v1178 = vld [vmem:[%s1155 + $0x58] sm:$0xf]
        %v1179 = vld [vmem:[%s1155 + $0x5c] sm:$0xf]
        %v1180 = vld [vmem:[%s1155 + $0x60] sm:$0xf]
        %v1181 = vld [vmem:[%s1155 + $0x64] sm:$0xf]
        %v1182 = vld [vmem:[%s1155 + $0x68] sm:$0xf]
        %v1183 = vld [vmem:[%s1155 + $0x6c] sm:$0xf]
        %v1184 = vld [vmem:[%s1155 + $0x70] sm:$0xf]
        %v1185 = vld [vmem:[%s1155 + $0x74] sm:$0xf]
        %v1186 = vld [vmem:[%s1155 + $0x78] sm:$0xf]
        %v1187 = vld [vmem:[%s1155 + $0x7c] sm:$0xf]
        %v1188 = vld [vmem:[%s1155 + $0x80] sm:$0xf]
        %v1189 = vld [vmem:[%s1155 + $0x84] sm:$0xf]
        %v1190 = vld [vmem:[%s1155 + $0x88] sm:$0xf]
        %v1191 = vld [vmem:[%s1155 + $0x8c] sm:$0xf]
        %v1192 = vld [vmem:[%s1155 + $0x90] sm:$0xf]
        %v1193 = vld [vmem:[%s1155 + $0x94] sm:$0xf]
        %v1194 = vld [vmem:[%s1155 + $0x98] sm:$0xf]
        %v1195 = vld [vmem:[%s1155 + $0x9c] sm:$0xf]
        %v1196 = vld [vmem:[%s1155 + $0xa0] sm:$0xf]
        %v1197 = vld [vmem:[%s1155 + $0xa4] sm:$0xf]
        %v1198 = vld [vmem:[%s1155 + $0xa8] sm:$0xf]
        %v1199 = vld [vmem:[%s1155 + $0xac] sm:$0xf]
        %v1200 = vld [vmem:[%s1155 + $0xb0] sm:$0xf]
        %v1201 = vld [vmem:[%s1155 + $0xb4] sm:$0xf]
        %v1202 = vld [vmem:[%s1155 + $0xb8] sm:$0xf]
        %v1203 = vld [vmem:[%s1155 + $0xbc] sm:$0xf]
        %v1252 = vunpack.c.l.b16 %v1156
        %v1253 = vunpack.c.l.b16 %v1157
        %v1254 = vunpack.c.l.b16 %v1158
        %v1255 = vunpack.c.l.b16 %v1159
        %v1256 = vunpack.c.l.b16 %v1160
        %v1257 = vunpack.c.l.b16 %v1161
        %v1258 = vunpack.c.l.b16 %v1162
        %v1259 = vunpack.c.l.b16 %v1163
        %v1260 = vunpack.c.l.b16 %v1164
        %v1261 = vunpack.c.l.b16 %v1165
        %v1262 = vunpack.c.l.b16 %v1166
        %v1263 = vunpack.c.l.b16 %v1167
        %v1264 = vunpack.c.l.b16 %v1168
        %v1265 = vunpack.c.l.b16 %v1169
        %v1266 = vunpack.c.l.b16 %v1170
        %v1267 = vunpack.c.l.b16 %v1171
        %v1268 = vunpack.c.l.b16 %v1172
        %v1269 = vunpack.c.l.b16 %v1173
        %v1270 = vunpack.c.l.b16 %v1174
        %v1271 = vunpack.c.l.b16 %v1175
        %v1272 = vunpack.c.l.b16 %v1176
        %v1273 = vunpack.c.l.b16 %v1177
        %v1274 = vunpack.c.l.b16 %v1178
        %v1275 = vunpack.c.l.b16 %v1179
        %v1276 = vunpack.c.l.b16 %v1180
        %v1277 = vunpack.c.l.b16 %v1181
        %v1278 = vunpack.c.l.b16 %v1182
        %v1279 = vunpack.c.l.b16 %v1183
        %v1280 = vunpack.c.l.b16 %v1184
        %v1281 = vunpack.c.l.b16 %v1185
        %v1282 = vunpack.c.l.b16 %v1186
        %v1283 = vunpack.c.l.b16 %v1187
        %v1284 = vunpack.c.l.b16 %v1188
        %v1285 = vunpack.c.l.b16 %v1189
        %v1286 = vunpack.c.l.b16 %v1190
        %v1287 = vunpack.c.l.b16 %v1191
        %v1288 = vunpack.c.l.b16 %v1192
        %v1289 = vunpack.c.l.b16 %v1193
        %v1290 = vunpack.c.l.b16 %v1194
        %v1291 = vunpack.c.l.b16 %v1195
        %v1292 = vunpack.c.l.b16 %v1196
        %v1293 = vunpack.c.l.b16 %v1197
        %v1294 = vunpack.c.l.b16 %v1198
        %v1295 = vunpack.c.l.b16 %v1199
        %v1296 = vunpack.c.l.b16 %v1200
        %v1297 = vunpack.c.l.b16 %v1201
        %v1298 = vunpack.c.l.b16 %v1202
        %v1299 = vunpack.c.l.b16 %v1203
        %v1300 = vpack.c.b16 %v1253, %v1252
        %v1301 = vpack.c.b16 %v1255, %v1254
        %v1302 = vpack.c.b16 %v1257, %v1256
        %v1303 = vpack.c.b16 %v1259, %v1258
        %v1304 = vpack.c.b16 %v1261, %v1260
        %v1305 = vpack.c.b16 %v1263, %v1262
        %v1306 = vpack.c.b16 %v1265, %v1264
        %v1307 = vpack.c.b16 %v1267, %v1266
        %v1308 = vpack.c.b16 %v1269, %v1268
        %v1309 = vpack.c.b16 %v1271, %v1270
        %v1310 = vpack.c.b16 %v1273, %v1272
        %v1311 = vpack.c.b16 %v1275, %v1274
        %v1312 = vpack.c.b16 %v1277, %v1276
        %v1313 = vpack.c.b16 %v1279, %v1278
        %v1314 = vpack.c.b16 %v1281, %v1280
        %v1315 = vpack.c.b16 %v1283, %v1282
        %v1316 = vpack.c.b16 %v1285, %v1284
        %v1317 = vpack.c.b16 %v1287, %v1286
        %v1318 = vpack.c.b16 %v1289, %v1288
        %v1319 = vpack.c.b16 %v1291, %v1290
        %v1320 = vpack.c.b16 %v1293, %v1292
        %v1321 = vpack.c.b16 %v1295, %v1294
        %v1322 = vpack.c.b16 %v1297, %v1296
        %v1323 = vpack.c.b16 %v1299, %v1298
        %1348 = vmatprep.subr.bf16.mxu0 0
        %1349 = vmatpush1.bf16.msra.mxu0 %v1300
        %1350 = vmatprep.subr.bf16.mxu0 0
        %1351 = vmatpush1.bf16.msra.mxu0 %v1301
        %1352 = vmatprep.subr.bf16.mxu0 0
        %1353 = vmatpush1.bf16.msra.mxu0 %v1302
        %1354 = vmatprep.subr.bf16.mxu0 0
        %1355 = vmatpush1.bf16.msra.mxu0 %v1303
        %1356 = vmatprep.subr.bf16.mxu0 0
        %1357 = vmatpush1.bf16.msra.mxu0 %v1304
        %1358 = vmatprep.subr.bf16.mxu0 0
        %1359 = vmatpush1.bf16.msra.mxu0 %v1305
        %1360 = vmatprep.subr.bf16.mxu0 0
        %1361 = vmatpush1.bf16.msra.mxu0 %v1306
        %1362 = vmatprep.subr.bf16.mxu0 0
        %1363 = vmatpush1.bf16.msra.mxu0 %v1307
        %1364 = vmatprep.subr.bf16.mxu0 0
        %1365 = vmatpush1.bf16.msra.mxu0 %v1308
        %1366 = vmatprep.subr.bf16.mxu0 0
        %1367 = vmatpush1.bf16.msra.mxu0 %v1309
        %1368 = vmatprep.subr.bf16.mxu0 0
        %1369 = vmatpush1.bf16.msra.mxu0 %v1310
        %1370 = vmatprep.subr.bf16.mxu0 0
        %1371 = vmatpush1.bf16.msra.mxu0 %v1311
        %1372 = vmatprep.subr.bf16.mxu0 0
        %1373 = vmatpush1.bf16.msra.mxu0 %v1312
        %1374 = vmatprep.subr.bf16.mxu0 0
        %1375 = vmatpush1.bf16.msra.mxu0 %v1313
        %1376 = vmatprep.subr.bf16.mxu0 0
        %1377 = vmatpush1.bf16.msra.mxu0 %v1314
        %1378 = vmatprep.subr.bf16.mxu0 0
        %1379 = vmatpush1.bf16.msra.mxu0 %v1315
        %1380 = vmatprep.mubr.bf16.mxu0 %v1132
        %1381 = vmatmul.mubr.bf16.gmra.mrb[0].mxu0 %v1131
        %v1382 = vpop.f32.mrb[0].mxu0
        %v1383 = vadd.f32 0.0, %v1382
        %v1384 = vpop.f32.mrb[0].mxu0
        %v1385 = vpop.f32.mrb[0].mxu0
        %v1386 = vadd.f32 0.0, %v1385
        %v1387 = vpop.f32.mrb[0].mxu0
        %1388 = vmatprep.mubr.bf16.mxu0 %v1135
        %1389 = vmatmul.mubr.bf16.gmra.mrb[0].mxu0 %v1134
        %v1390 = vpop.f32.mrb[0].mxu0
        %v1391 = vadd.f32 0.0, %v1390
        %v1392 = vpop.f32.mrb[0].mxu0
        %v1393 = vpop.f32.mrb[0].mxu0
        %v1394 = vadd.f32 0.0, %v1393
        %v1395 = vpop.f32.mrb[0].mxu0
        %1396 = vmatprep.mubr.bf16.mxu0 %v1138
        %1397 = vmatmul.mubr.bf16.gmra.mrb[0].mxu0 %v1137
        %v1398 = vpop.f32.mrb[0].mxu0
        %v1399 = vadd.f32 0.0, %v1398
        %v1400 = vpop.f32.mrb[0].mxu0
        %v1401 = vpop.f32.mrb[0].mxu0
        %v1402 = vadd.f32 0.0, %v1401
        %v1403 = vpop.f32.mrb[0].mxu0
        %1404 = vmatprep.mubr.bf16.mxu0 %v1141
        %1405 = vmatmul.mubr.bf16.gmra.mrb[0].mxu0 %v1140
        %v1406 = vpop.f32.mrb[0].mxu0
        %v1407 = vadd.f32 0.0, %v1406
        %v1408 = vpop.f32.mrb[0].mxu0
        %v1409 = vpop.f32.mrb[0].mxu0
        %v1410 = vadd.f32 0.0, %v1409
        %v1411 = vpop.f32.mrb[0].mxu0
        %1412 = vmatprep.mubr.bf16.mxu0 %v1144
        %1413 = vmatmul.mubr.bf16.gmra.mrb[0].mxu0 %v1143
        %v1414 = vpop.f32.mrb[0].mxu0
        %v1415 = vadd.f32 0.0, %v1414
        %v1416 = vpop.f32.mrb[0].mxu0
        %v1417 = vpop.f32.mrb[0].mxu0
        %v1418 = vadd.f32 0.0, %v1417
        %v1419 = vpop.f32.mrb[0].mxu0
        %1420 = vmatprep.mubr.bf16.mxu0 %v1147
        %1421 = vmatmul.mubr.bf16.gmra.mrb[0].mxu0 %v1146
        %v1422 = vpop.f32.mrb[0].mxu0
        %v1423 = vadd.f32 0.0, %v1422
        %v1424 = vpop.f32.mrb[0].mxu0
        %v1425 = vpop.f32.mrb[0].mxu0
        %v1426 = vadd.f32 0.0, %v1425
        %v1427 = vpop.f32.mrb[0].mxu0
        %1428 = vmatprep.mubr.bf16.mxu0 %v1150
        %1429 = vmatmul.mubr.bf16.gmra.mrb[0].mxu0 %v1149
        %v1430 = vpop.f32.mrb[0].mxu0
        %v1431 = vadd.f32 0.0, %v1430
        %v1432 = vpop.f32.mrb[0].mxu0
        %v1433 = vpop.f32.mrb[0].mxu0
        %v1434 = vadd.f32 0.0, %v1433
        %v1435 = vpop.f32.mrb[0].mxu0
        %1436 = vmatprep.mubr.bf16.mxu0 %v1153
        %1437 = vmatmul.mubr.bf16.gmra.mrb[0].mxu0 %v1152
        %v1438 = vpop.f32.mrb[0].mxu0
        %v1439 = vadd.f32 0.0, %v1438
        %v1440 = vpop.f32.mrb[0].mxu0
        %v1441 = vpop.f32.mrb[0].mxu0
        %v1442 = vadd.f32 0.0, %v1441
        %v1443 = vpop.f32.mrb[0].mxu0
        %1444 = vdwg.mxu0
        %1445 = vmatprep.subr.bf16.mxu0 0
        %1446 = vmatpush1.bf16.msra.mxu0 %v1316
        %1447 = vmatprep.subr.bf16.mxu0 0
        %1448 = vmatpush1.bf16.msra.mxu0 %v1317
        %1449 = vmatprep.subr.bf16.mxu0 0
        %1450 = vmatpush1.bf16.msra.mxu0 %v1318
        %1451 = vmatprep.subr.bf16.mxu0 0
        %1452 = vmatpush1.bf16.msra.mxu0 %v1319
        %1453 = vmatprep.subr.bf16.mxu0 0
        %1454 = vmatpush1.bf16.msra.mxu0 %v1320
        %1455 = vmatprep.subr.bf16.mxu0 0
        %1456 = vmatpush1.bf16.msra.mxu0 %v1321
        %1457 = vmatprep.subr.bf16.mxu0 0
        %1458 = vmatpush1.bf16.msra.mxu0 %v1322
        %1459 = vmatprep.subr.bf16.mxu0 0
        %1460 = vmatpush1.bf16.msra.mxu0 %v1323
        %1461 = vmatprep.subr.bf16.mxu0 0
        %1462 = vmatpush1.bf16.msra.mxu0 0
        %1463 = vmatprep.subr.bf16.mxu0 0
        %1464 = vmatpush1.bf16.msra.mxu0 0
        %1465 = vmatprep.subr.bf16.mxu0 0
        %1466 = vmatpush1.bf16.msra.mxu0 0
        %1467 = vmatprep.subr.bf16.mxu0 0
        %1468 = vmatpush1.bf16.msra.mxu0 0
        %1469 = vmatprep.subr.bf16.mxu0 0
        %1470 = vmatpush1.bf16.msra.mxu0 0
        %1471 = vmatprep.subr.bf16.mxu0 0
        %1472 = vmatpush1.bf16.msra.mxu0 0
        %1473 = vmatprep.subr.bf16.mxu0 0
        %1474 = vmatpush1.bf16.msra.mxu0 0
        %1475 = vmatprep.subr.bf16.mxu0 0
        %1476 = vmatpush1.bf16.msra.mxu0 0
        %1477 = vmatprep.mubr.bf16.mxu0 0
        %1478 = vmatmul.mubr.bf16.gmra.mrb[0].mxu0 %v1133
        %v1479 = vpop.f32.mrb[0].mxu0
        %v1480 = vadd.f32 %v1383, %v1479
        %v1481 = vpop.f32.mrb[0].mxu0
        %v1482 = vpop.f32.mrb[0].mxu0
        %v1483 = vadd.f32 %v1386, %v1482
        %v1484 = vpop.f32.mrb[0].mxu0
        %1485 = vmatprep.mubr.bf16.mxu0 0
        %1486 = vmatmul.mubr.bf16.gmra.mrb[0].mxu0 %v1136
        %v1487 = vpop.f32.mrb[0].mxu0
        %v1488 = vadd.f32 %v1391, %v1487
        %v1489 = vpop.f32.mrb[0].mxu0
        %v1490 = vpop.f32.mrb[0].mxu0
        %v1491 = vadd.f32 %v1394, %v1490
        %v1492 = vpop.f32.mrb[0].mxu0
        %1493 = vmatprep.mubr.bf16.mxu0 0
        %1494 = vmatmul.mubr.bf16.gmra.mrb[0].mxu0 %v1139
        %v1495 = vpop.f32.mrb[0].mxu0
        %v1496 = vadd.f32 %v1399, %v1495
        %v1497 = vpop.f32.mrb[0].mxu0
        %v1498 = vpop.f32.mrb[0].mxu0
        %v1499 = vadd.f32 %v1402, %v1498
        %v1500 = vpop.f32.mrb[0].mxu0
        %1501 = vmatprep.mubr.bf16.mxu0 0
        %1502 = vmatmul.mubr.bf16.gmra.mrb[0].mxu0 %v1142
        %v1503 = vpop.f32.mrb[0].mxu0
        %v1504 = vadd.f32 %v1407, %v1503
        %v1505 = vpop.f32.mrb[0].mxu0
        %v1506 = vpop.f32.mrb[0].mxu0
        %v1507 = vadd.f32 %v1410, %v1506
        %v1508 = vpop.f32.mrb[0].mxu0
        %1509 = vmatprep.mubr.bf16.mxu0 0
        %1510 = vmatmul.mubr.bf16.gmra.mrb[0].mxu0 %v1145
        %v1511 = vpop.f32.mrb[0].mxu0
        %v1512 = vadd.f32 %v1415, %v1511
        %v1513 = vpop.f32.mrb[0].mxu0
        %v1514 = vpop.f32.mrb[0].mxu0
        %v1515 = vadd.f32 %v1418, %v1514
        %v1516 = vpop.f32.mrb[0].mxu0
        %1517 = vmatprep.mubr.bf16.mxu0 0
        %1518 = vmatmul.mubr.bf16.gmra.mrb[0].mxu0 %v1148
        %v1519 = vpop.f32.mrb[0].mxu0
        %v1520 = vadd.f32 %v1423, %v1519
        %v1521 = vpop.f32.mrb[0].mxu0
        %v1522 = vpop.f32.mrb[0].mxu0
        %v1523 = vadd.f32 %v1426, %v1522
        %v1524 = vpop.f32.mrb[0].mxu0
        %1525 = vmatprep.mubr.bf16.mxu0 0
        %1526 = vmatmul.mubr.bf16.gmra.mrb[0].mxu0 %v1151
        %v1527 = vpop.f32.mrb[0].mxu0
        %v1528 = vadd.f32 %v1431, %v1527
        %v1529 = vpop.f32.mrb[0].mxu0
        %v1530 = vpop.f32.mrb[0].mxu0
        %v1531 = vadd.f32 %v1434, %v1530
        %v1532 = vpop.f32.mrb[0].mxu0
        %1533 = vmatprep.mubr.bf16.mxu0 0
        %1534 = vmatmul.mubr.bf16.gmra.mrb[0].mxu0 %v1154
        %v1535 = vpop.f32.mrb[0].mxu0
        %v1536 = vadd.f32 %v1439, %v1535
        %v1537 = vpop.f32.mrb[0].mxu0
        %v1538 = vpop.f32.mrb[0].mxu0
        %v1539 = vadd.f32 %v1442, %v1538
        %v1540 = vpop.f32.mrb[0].mxu0
        %1541 = vdwg.mxu0
        %v1542 = vadd.f32 %v1068, %v1480
        %v1543 = vadd.f32 %v1071, %v1483
        %v1544 = vadd.f32 %v1076, %v1488
        %v1545 = vadd.f32 %v1079, %v1491
        %v1546 = vadd.f32 %v1084, %v1496
        %v1547 = vadd.f32 %v1087, %v1499
        %v1548 = vadd.f32 %v1092, %v1504
        %v1549 = vadd.f32 %v1095, %v1507
        %v1550 = vadd.f32 %v1100, %v1512
        %v1551 = vadd.f32 %v1103, %v1515
        %v1552 = vadd.f32 %v1108, %v1520
        %v1553 = vadd.f32 %v1111, %v1523
        %v1554 = vadd.f32 %v1116, %v1528
        %v1555 = vadd.f32 %v1119, %v1531
        %v1556 = vadd.f32 %v1124, %v1536
        %v1557 = vadd.f32 %v1127, %v1539
        %v1558 = vld [vmem:[%s2] sm:$0x1]
        %v1560 = vlaneseq
        %v1561 = vshrl.u32 %v1560, 7
        %v1562 = vsub.s32 0, %v1561
        %v1563 = vrot.slane %v1558, %v1562
        %v1565 = vadd.f32 %v1542, %v1563
        %v1566 = vadd.f32 %v1543, %v1563
        %v1567 = vadd.f32 %v1544, %v1563
        %v1568 = vadd.f32 %v1545, %v1563
        %v1569 = vadd.f32 %v1546, %v1563
        %v1570 = vadd.f32 %v1547, %v1563
        %v1571 = vadd.f32 %v1548, %v1563
        %v1572 = vadd.f32 %v1549, %v1563
        %v1573 = vadd.f32 %v1550, %v1563
        %v1574 = vadd.f32 %v1551, %v1563
        %v1575 = vadd.f32 %v1552, %v1563
        %v1576 = vadd.f32 %v1553, %v1563
        %v1577 = vadd.f32 %v1554, %v1563
        %v1578 = vadd.f32 %v1555, %v1563
        %v1579 = vadd.f32 %v1556, %v1563
        %v1580 = vadd.f32 %v1557, %v1563
        %v1581 = vmax.f32 %v1565, 0.0
        %v1582 = vmax.f32 %v1566, 0.0
        %v1583 = vmax.f32 %v1567, 0.0
        %v1584 = vmax.f32 %v1568, 0.0
        %v1585 = vmax.f32 %v1569, 0.0
        %v1586 = vmax.f32 %v1570, 0.0
        %v1587 = vmax.f32 %v1571, 0.0
        %v1588 = vmax.f32 %v1572, 0.0
        %v1589 = vmax.f32 %v1573, 0.0
        %v1590 = vmax.f32 %v1574, 0.0
        %v1591 = vmax.f32 %v1575, 0.0
        %v1592 = vmax.f32 %v1576, 0.0
        %v1593 = vmax.f32 %v1577, 0.0
        %v1594 = vmax.f32 %v1578, 0.0
        %v1595 = vmax.f32 %v1579, 0.0
        %v1596 = vmax.f32 %v1580, 0.0
        %1597 = vst [vmem:[%s177] sm:$0xff] %v1581
        %1598 = vst [vmem:[%s177 + $0x8] sm:$0xff] %v1582
        %1599 = vst [vmem:[%s177 + $0x10] sm:$0xff] %v1583
        %1600 = vst [vmem:[%s177 + $0x18] sm:$0xff] %v1584
        %1601 = vst [vmem:[%s177 + $0x20] sm:$0xff] %v1585
        %1602 = vst [vmem:[%s177 + $0x28] sm:$0xff] %v1586
        %1603 = vst [vmem:[%s177 + $0x30] sm:$0xff] %v1587
        %1604 = vst [vmem:[%s177 + $0x38] sm:$0xff] %v1588
        %1605 = vst [vmem:[%s177 + $0x40] sm:$0xff] %v1589
        %1606 = vst [vmem:[%s177 + $0x48] sm:$0xff] %v1590
        %1607 = vst [vmem:[%s177 + $0x50] sm:$0xff] %v1591
        %1608 = vst [vmem:[%s177 + $0x58] sm:$0xff] %v1592
        %1609 = vst [vmem:[%s177 + $0x60] sm:$0xff] %v1593
        %1610 = vst [vmem:[%s177 + $0x68] sm:$0xff] %v1594
        %1611 = vst [vmem:[%s177 + $0x70] sm:$0xff] %v1595
        %1612 = vst [vmem:[%s177 + $0x78] sm:$0xff] %v1596
        %s1613 = sand.u32 %s107, 1
        %s1614 = scalar_lea.sflag [#allocation4], %s1613
        %s1615 = sand.u32 %s107, 1
        %s1616 = smul.addr %s1615, 128
        %s1617 = scalar_lea.vmem [#allocation3], %s1616
        // Predicated region
        $region33: #{tpu_custom_call.1} parent=31 // pred_check
          %p1618 = pneg %p117
        $region34: #{tpu_custom_call.1} parent=31 // pred_check_branch
          %1620 = sbr.rel (%p1618) target = $region36
        $region35: #{tpu_custom_call.1} parent=31 // pred_region
          %s1621 = smul.u32 8, %s22
          %s1623 = ssub.s32 2048, 2048
          %1624 = vsyncadd %s1614, %s1623
          %s1625 = smul.addr %s1621, 2
          %s1626 = smul.addr %s21, 16
          %s1627 = sadd.s32 %s1625, %s1626
          %s1628 = smul.addr %s1627, 128
          %s1629 = scalar_lea.hbm %s3, %s1628
          %s1630 = sshll.u32 %s1617, 4
          %s1631 = int_to_ptr.vmem [resolvable:$true] %s1630
          %1636 = dma.vmem_to_hbm [thread:$0]  %s1631, 2048, %s1629, %s1614, 128, 128, 8
        $region36: #{tpu_custom_call.1} parent=31 // pred_fallthru
          _
      $region32: #{tpu_custom_call.1} parent=5 // pred_fallthru
        _
      %p1637 = scmp.le.s32.totalorder 2, %s12
      // Predicated region
      $region37: #{tpu_custom_call.1} parent=5 // pred_check
        %p1638 = pneg %p1637
      $region38: #{tpu_custom_call.1} parent=5 // pred_check_branch
        %1640 = sbr.rel (%p1638) target = $region40
      $region39: #{tpu_custom_call.1} parent=5 // pred_region
        %s1641 = ssub.s32 %s12, 2
        // Predicated region
        $region41: #{tpu_custom_call.1} parent=39 // pred_check
          %p1642 = pneg %p123
        $region42: #{tpu_custom_call.1} parent=39 // pred_check_branch
          %1644 = sbr.rel (%p1642) target = $region44
        $region43: #{tpu_custom_call.1} parent=39 // pred_region
          %s1645 = sand.u32 %s108, 1
          %s1646 = scalar_lea.sflag [#allocation4], %s1645
          %s1647 = sand.u32 %s108, 1
          %s1648 = smul.addr %s1647, 128
          %s1649 = scalar_lea.vmem [#allocation3], %s1648
          %1650 = dma.done %s1646, 2048
        $region44: #{tpu_custom_call.1} parent=39 // pred_fallthru
          _
      $region40: #{tpu_custom_call.1} parent=5 // pred_fallthru
        _
    $region6: #{tpu_custom_call.1} parent=1 // loop_footer
      %s16 = sadd.s32 1, %s12
    $region7: #{tpu_custom_call.1} parent=1 // loop_footer_branch
      %11 = sbr.rel target = $region3
    $region8: #{tpu_custom_call.1} parent=1 // loop_exit
      _
    %1651 = vsyncpa [#allocation4], 1
    %s1652 = scalar_lea.sflag [#allocation4], 1
    %1653 = vsyncpa %s1652, 1

</llo_original>
